<compile_context>
chip_gen: v6e
topology: v6e:2x2x1
jax: 0.10.0
libtpu: 0.0.40
codegen_flags: <defaults>
</compile_context>

<pallas_src>
import functools

import jax
import jax.numpy as jnp
from jax import lax
from jax.experimental import pallas as pl
from jax.experimental.pallas import tpu as pltpu


K = 5  # conv kernel size


# ----------------------------- Pallas kernels ------------------------------

def _conv_pool_relu_kernel(p_ref, w_ref, b_ref, o_ref, *, pool_rows):
    """Fused conv(as im2col matmul) + bias + 2x2 maxpool + relu, one image.

    p_ref: (1, 4*pool_rows, F)  patch rows, pooling-corner major
    w_ref: (F, OC)              conv weight, row order (kh, kw, c)
    b_ref: (1, OC)
    o_ref: (1, pool_rows, OC)   pooled+relu output, rows in (ph, pw) raster
    """
    y = jnp.dot(p_ref[0], w_ref[...], preferred_element_type=jnp.float32)
    y = y + b_ref[...]                                   # (4*PR, OC)
    pr = pool_rows
    m = jnp.maximum(jnp.maximum(y[0 * pr:1 * pr], y[1 * pr:2 * pr]),
                    jnp.maximum(y[2 * pr:3 * pr], y[3 * pr:4 * pr]))
    o_ref[0] = jnp.maximum(m, 0.0).astype(o_ref.dtype)


def _mlp_head_kernel(x_ref, w1_ref, b1_ref, w2_ref, b2_ref, o_ref):
    """Fused fc1 + relu + fc2 + log_softmax on a tile of rows."""
    h = jnp.dot(x_ref[...], w1_ref[...], preferred_element_type=jnp.float32)
    h = jnp.maximum(h + b1_ref[...], 0.0)
    z = jnp.dot(h, w2_ref[...], preferred_element_type=jnp.float32)
    z = z + b2_ref[...]
    z = z - jnp.max(z, axis=-1, keepdims=True)
    lse = jnp.log(jnp.sum(jnp.exp(z), axis=-1, keepdims=True))
    o_ref[...] = (z - lse).astype(o_ref.dtype)


# ------------------------------ Pallas wrappers -----------------------------

def conv_pool_relu(patches, w, b, pool_rows):
    """patches: (N, 4*PR, F) corner-major; w: (F, OC); b: (1, OC)."""
    n, rows4, f = patches.shape
    oc = w.shape[1]
    return pl.pallas_call(
        functools.partial(_conv_pool_relu_kernel, pool_rows=pool_rows),
        out_shape=jax.ShapeDtypeStruct((n, pool_rows, oc), jnp.float32),
        grid=(n,),
        in_specs=[
            pl.BlockSpec((1, rows4, f), lambda i: (i, 0, 0)),
            pl.BlockSpec((f, oc), lambda i: (0, 0)),
            pl.BlockSpec((1, oc), lambda i: (0, 0)),
        ],
        out_specs=pl.BlockSpec((1, pool_rows, oc), lambda i: (i, 0, 0)),
        compiler_params=pltpu.CompilerParams(
            dimension_semantics=("parallel",)),
    )(patches, w, b)


def mlp_head(x, w1, b1, w2, b2, row_tile=256):
    """x: (N, 320); w1: (320, 50); w2: (50, 10); biases (1, ·)."""
    n, d = x.shape
    h = w1.shape[1]
    c = w2.shape[1]
    tb = min(n, row_tile)
    return pl.pallas_call(
        _mlp_head_kernel,
        out_shape=jax.ShapeDtypeStruct((n, c), jnp.float32),
        grid=(pl.cdiv(n, tb),),
        in_specs=[
            pl.BlockSpec((tb, d), lambda i: (i, 0)),
            pl.BlockSpec((d, h), lambda i: (0, 0)),
            pl.BlockSpec((1, h), lambda i: (0, 0)),
            pl.BlockSpec((h, c), lambda i: (0, 0)),
            pl.BlockSpec((1, c), lambda i: (0, 0)),
        ],
        out_specs=pl.BlockSpec((tb, c), lambda i: (i, 0)),
        compiler_params=pltpu.CompilerParams(
            dimension_semantics=("parallel",)),
    )(x, w1, b1, w2, b2)


# ------------------------- im2col glue (one slab per stage) -----------------

def pool_ordered_patches(x):
    """x: (N, H, W, C) NHWC -> (N, 4*PH*PW, K*K*C) im2col patch rows ordered
    pooling-corner major: [(0,0) windows raster | (0,1) | (1,0) | (1,1)].
    Patch feature order is (kh, kw, c)."""
    n, hgt, wid, c = x.shape
    oh, ow = hgt - K + 1, wid - K + 1
    ph, pw = oh // 2, ow // 2
    f = K * K * c
    cols = [x[:, kh:kh + oh, kw:kw + ow, :]
            for kh in range(K) for kw in range(K)]       # (N, OH, OW, C) each
    p = jnp.stack(cols, axis=3)                          # (N, OH, OW, K*K, C)
    p = p.reshape(n, oh, ow, f)                          # feature = (kh, kw, c)
    p = p.reshape(n, ph, 2, pw, 2, f)                    # (N, i, dr, j, dc, F)
    p = p.transpose(0, 2, 4, 1, 3, 5)                    # (N, dr, dc, i, j, F)
    return p.reshape(n, 4 * ph * pw, f)


# ------------------------------- parameters ---------------------------------

def init_params(key):
    """PyTorch-default-style uniform init (native PyTorch layouts)."""
    def uni(k, shape, fan_in):
        bound = 1.0 / jnp.sqrt(float(fan_in))
        return jax.random.uniform(k, shape, jnp.float32, -bound, bound)

    ks = jax.random.split(key, 8)
    return {
        "conv1_w": uni(ks[0], (10, 1, 5, 5), 1 * 5 * 5),
        "conv1_b": uni(ks[1], (10,), 1 * 5 * 5),
        "conv2_w": uni(ks[2], (20, 10, 5, 5), 10 * 5 * 5),
        "conv2_b": uni(ks[3], (20,), 10 * 5 * 5),
        "fc1_w": uni(ks[4], (50, 320), 320),   # (out, in), PyTorch layout
        "fc1_b": uni(ks[5], (50,), 320),
        "fc2_w": uni(ks[6], (10, 50), 50),
        "fc2_b": uni(ks[7], (10,), 50),
    }


def prepare_params(params):
    """One-time (outside jit) weight re-layout for the fused kernels."""
    # conv weights -> (F, OC) with row order (kh, kw, c), matching the patches.
    w1 = params["conv1_w"].transpose(2, 3, 1, 0).reshape(K * K * 1, 10)
    w2 = params["conv2_w"].transpose(2, 3, 1, 0).reshape(K * K * 10, 20)
    # fc1 columns permuted from PyTorch's NCHW flatten order (c,h,w) to the
    # NHWC flatten order (h,w,c) produced by the conv2 kernel output.
    fc1 = params["fc1_w"].reshape(50, 20, 4, 4).transpose(0, 2, 3, 1)
    fc1 = fc1.reshape(50, 320).T                          # (320, 50)
    return {
        "w1": w1, "b1": params["conv1_b"].reshape(1, 10),
        "w2": w2, "b2": params["conv2_b"].reshape(1, 20),
        "fc1_w": fc1, "fc1_b": params["fc1_b"].reshape(1, 50),
        "fc2_w": params["fc2_w"].T, "fc2_b": params["fc2_b"].reshape(1, 10),
    }


# ------------------------------- Net forward --------------------------------

@jax.jit
def net_forward(p, x):
    # x: (N, 1, 28, 28) NCHW float32
    n = x.shape[0]
    x = x.transpose(0, 2, 3, 1)                          # NHWC (N, 28, 28, 1)

    # conv1 -> maxpool2 -> relu  (one fused kernel)
    a1 = conv_pool_relu(pool_ordered_patches(x), p["w1"], p["b1"],
                        pool_rows=144)                   # (N,144,10)=(N,12,12,10)
    a1 = a1.reshape(n, 12, 12, 10)

    # conv2 -> dropout2d -> maxpool2 -> relu  (one fused kernel)
    # TODO(synk): Dropout2d / F.dropout are identity in eval mode; training-mode
    # stochastic dropout (pltpu.prng_seed/prng_random_bits) not implemented.
    a2 = conv_pool_relu(pool_ordered_patches(a1), p["w2"], p["b2"],
                        pool_rows=16)                    # (N,16,20)=(N,4,4,20)

    # flatten; fc1 weights were pre-permuted to NHWC order so this reshape is
    # equivalent to PyTorch's x.view(-1, 320) on the NCHW activation.
    y = a2.reshape(n, 320)

    # fc1 + relu + (dropout: identity) + fc2 + log_softmax  (one fused kernel)
    return mlp_head(y, p["fc1_w"], p["fc1_b"], p["fc2_w"], p["fc2_b"])


# ----------------------------- pure-JAX reference ----------------------------

def reference_forward(params, x):
    def conv(x, w, b):
        y = lax.conv_general_dilated(
            x, w, window_strides=(1, 1), padding="VALID",
            dimension_numbers=("NCHW", "OIHW", "NCHW"),
            precision=lax.Precision.HIGHEST)
        return y + b.reshape(1, -1, 1, 1)

    def pool(y):
        return lax.reduce_window(y, -jnp.inf, lax.max,
                                 (1, 1, 2, 2), (1, 1, 2, 2), "VALID")

    y = jax.nn.relu(pool(conv(x, params["conv1_w"], params["conv1_b"])))
    y = jax.nn.relu(pool(conv(y, params["conv2_w"], params["conv2_b"])))
    y = y.reshape(y.shape[0], -1)                         # NCHW flatten (c,h,w)
    y = jax.nn.relu(jnp.dot(y, params["fc1_w"].T,
                            precision=lax.Precision.HIGHEST)
                    + params["fc1_b"])
    y = jnp.dot(y, params["fc2_w"].T,
                precision=lax.Precision.HIGHEST) + params["fc2_b"]
    return jax.nn.log_softmax(y, axis=-1)


if __name__ == "__main__":
    key = jax.random.PRNGKey(0)
    pkey, xkey = jax.random.split(key)
    params = init_params(pkey)
    prepared = prepare_params(params)
    x = jax.random.normal(xkey, (2, 1, 28, 28), dtype=jnp.float32)

    out = net_forward(prepared, x)
    jax.block_until_ready(out)

    assert out.shape == (2, 10)
    # log_softmax rows must sum (in prob space) to ~1
    assert jnp.allclose(jnp.sum(jnp.exp(out), axis=1), 1.0, atol=1e-4)
    # check against a pure-JAX/XLA reference of the PyTorch module
    ref = reference_forward(params, x)
    assert jnp.allclose(out, ref, atol=1e-2, rtol=1e-2), (
        float(jnp.max(jnp.abs(out - ref))))
    print("KERNEL_OK")
</pallas_src>

<mosaic_0001>
module attributes {stable_mosaic.version = 11 : i64} {
  func.func @_conv_pool_relu_kernel(%arg0: i32, %arg1: memref<1x576x25xf32, #tpu.memory_space<vmem>>, %arg2: memref<25x10xf32, #tpu.memory_space<vmem>>, %arg3: memref<1x10xf32, #tpu.memory_space<vmem>>, %arg4: memref<1x144x10xf32, #tpu.memory_space<vmem>>) attributes {dimension_semantics = [#tpu.dimension_semantics<parallel>], iteration_bounds = array<i64: 2>, scalar_prefetch = 0 : i64, scratch_operands = 0 : i64, tpu.core_type = #tpu.core_type<tc>, window_params = [{transform_indices = @transform_0, window_bounds = array<i64: 1, 576, 25>}, {pipeline_mode = #tpu.pipeline_mode<synchronous>, transform_indices = @transform_1, window_bounds = array<i64: 25, 10>}, {pipeline_mode = #tpu.pipeline_mode<synchronous>, transform_indices = @transform_2, window_bounds = array<i64: 1, 10>}, {transform_indices = @transform_3, window_bounds = array<i64: 1, 144, 10>}]} {
    %c0 = arith.constant 0 : index
    %c0_0 = arith.constant 0 : index
    %c0_1 = arith.constant 0 : index
    %0 = vector.load %arg1[%c0, %c0_0, %c0_1] : memref<1x576x25xf32, #tpu.memory_space<vmem>>, vector<1x576x25xf32>
    %1 = vector.shape_cast %0 : vector<1x576x25xf32> to vector<576x25xf32>
    %c0_2 = arith.constant 0 : index
    %c0_3 = arith.constant 0 : index
    %2 = vector.load %arg2[%c0_2, %c0_3] : memref<25x10xf32, #tpu.memory_space<vmem>>, vector<25x10xf32>
    %cst = arith.constant dense<0.000000e+00> : vector<576x10xf32>
    %3 = tpu.matmul %1, %2, %cst {dimension_numbers = #tpu.dot_dimension_numbers<[1], [0], [0], [1], [0, 0, 1, 1], [], []>} : vector<576x25xf32>, vector<25x10xf32>, vector<576x10xf32> -> vector<576x10xf32>
    %c0_4 = arith.constant 0 : index
    %c0_5 = arith.constant 0 : index
    %4 = vector.load %arg3[%c0_4, %c0_5] : memref<1x10xf32, #tpu.memory_space<vmem>>, vector<1x10xf32>
    %5 = vector.broadcast %4 : vector<1x10xf32> to vector<576x10xf32>
    %6 = arith.addf %3, %5 : vector<576x10xf32>
    %7 = vector.extract_strided_slice %6 {offsets = [0, 0], sizes = [144, 10], strides = [1, 1]} : vector<576x10xf32> to vector<144x10xf32>
    %8 = vector.extract_strided_slice %6 {offsets = [144, 0], sizes = [144, 10], strides = [1, 1]} : vector<576x10xf32> to vector<144x10xf32>
    %9 = arith.maximumf %7, %8 : vector<144x10xf32>
    %10 = vector.extract_strided_slice %6 {offsets = [288, 0], sizes = [144, 10], strides = [1, 1]} : vector<576x10xf32> to vector<144x10xf32>
    %11 = vector.extract_strided_slice %6 {offsets = [432, 0], sizes = [144, 10], strides = [1, 1]} : vector<576x10xf32> to vector<144x10xf32>
    %12 = arith.maximumf %10, %11 : vector<144x10xf32>
    %13 = arith.maximumf %9, %12 : vector<144x10xf32>
    %cst_6 = arith.constant 0.000000e+00 : f32
    %14 = vector.broadcast %cst_6 : f32 to vector<144x10xf32>
    %15 = arith.maximumf %13, %14 : vector<144x10xf32>
    %c0_7 = arith.constant 0 : index
    %c0_8 = arith.constant 0 : index
    %c0_9 = arith.constant 0 : index
    %16 = vector.load %arg4[%c0_7, %c0_8, %c0_9] : memref<1x144x10xf32, #tpu.memory_space<vmem>>, vector<1x144x10xf32>
    %17 = vector.shape_cast %16 : vector<1x144x10xf32> to vector<144x10xf32>
    %18 = vector.shape_cast %15 : vector<144x10xf32> to vector<1x144x10xf32>
    tpu.vector_store %arg4[%c0_7, %c0_8, %c0_9], %18 {strides = array<i32>} : memref<1x144x10xf32, #tpu.memory_space<vmem>>, vector<1x144x10xf32>,
    return
  }
  func.func @transform_0(%arg0: i32) -> (i32, i32, i32) {
    %c0_i32 = arith.constant 0 : i32
    %c0_i32_0 = arith.constant 0 : i32
    %c0_i32_1 = arith.constant 0 : i32
    return %arg0, %c0_i32, %c0_i32_0 : i32, i32, i32
  }
  func.func @transform_1(%arg0: i32) -> (i32, i32) {
    %c0_i32 = arith.constant 0 : i32
    %c0_i32_0 = arith.constant 0 : i32
    %c0_i32_1 = arith.constant 0 : i32
    return %c0_i32, %c0_i32_0 : i32, i32
  }
  func.func @transform_2(%arg0: i32) -> (i32, i32) {
    %c0_i32 = arith.constant 0 : i32
    %c0_i32_0 = arith.constant 0 : i32
    %c0_i32_1 = arith.constant 0 : i32
    return %c0_i32, %c0_i32_0 : i32, i32
  }
  func.func @transform_3(%arg0: i32) -> (i32, i32, i32) {
    %c0_i32 = arith.constant 0 : i32
    %c0_i32_0 = arith.constant 0 : i32
    %c0_i32_1 = arith.constant 0 : i32
    return %arg0, %c0_i32, %c0_i32_0 : i32, i32, i32
  }
}

module attributes {stable_mosaic.version = 11 : i64} {
  func.func @_conv_pool_relu_kernel(%arg0: i32, %arg1: memref<1x64x250xf32, #tpu.memory_space<vmem>>, %arg2: memref<250x20xf32, #tpu.memory_space<vmem>>, %arg3: memref<1x20xf32, #tpu.memory_space<vmem>>, %arg4: memref<1x16x20xf32, #tpu.memory_space<vmem>>) attributes {dimension_semantics = [#tpu.dimension_semantics<parallel>], iteration_bounds = array<i64: 2>, scalar_prefetch = 0 : i64, scratch_operands = 0 : i64, tpu.core_type = #tpu.core_type<tc>, window_params = [{transform_indices = @transform_0, window_bounds = array<i64: 1, 64, 250>}, {pipeline_mode = #tpu.pipeline_mode<synchronous>, transform_indices = @transform_1, window_bounds = array<i64: 250, 20>}, {pipeline_mode = #tpu.pipeline_mode<synchronous>, transform_indices = @transform_2, window_bounds = array<i64: 1, 20>}, {transform_indices = @transform_3, window_bounds = array<i64: 1, 16, 20>}]} {
    %c0 = arith.constant 0 : index
    %c0_0 = arith.constant 0 : index
    %c0_1 = arith.constant 0 : index
    %0 = vector.load %arg1[%c0, %c0_0, %c0_1] : memref<1x64x250xf32, #tpu.memory_space<vmem>>, vector<1x64x250xf32>
    %1 = vector.shape_cast %0 : vector<1x64x250xf32> to vector<64x250xf32>
    %c0_2 = arith.constant 0 : index
    %c0_3 = arith.constant 0 : index
    %2 = vector.load %arg2[%c0_2, %c0_3] : memref<250x20xf32, #tpu.memory_space<vmem>>, vector<250x20xf32>
    %cst = arith.constant dense<0.000000e+00> : vector<64x20xf32>
    %3 = tpu.matmul %1, %2, %cst {dimension_numbers = #tpu.dot_dimension_numbers<[1], [0], [0], [1], [0, 0, 1, 1], [], []>} : vector<64x250xf32>, vector<250x20xf32>, vector<64x20xf32> -> vector<64x20xf32>
    %c0_4 = arith.constant 0 : index
    %c0_5 = arith.constant 0 : index
    %4 = vector.load %arg3[%c0_4, %c0_5] : memref<1x20xf32, #tpu.memory_space<vmem>>, vector<1x20xf32>
    %5 = vector.broadcast %4 : vector<1x20xf32> to vector<64x20xf32>
    %6 = arith.addf %3, %5 : vector<64x20xf32>
    %7 = vector.extract_strided_slice %6 {offsets = [0, 0], sizes = [16, 20], strides = [1, 1]} : vector<64x20xf32> to vector<16x20xf32>
    %8 = vector.extract_strided_slice %6 {offsets = [16, 0], sizes = [16, 20], strides = [1, 1]} : vector<64x20xf32> to vector<16x20xf32>
    %9 = arith.maximumf %7, %8 : vector<16x20xf32>
    %10 = vector.extract_strided_slice %6 {offsets = [32, 0], sizes = [16, 20], strides = [1, 1]} : vector<64x20xf32> to vector<16x20xf32>
    %11 = vector.extract_strided_slice %6 {offsets = [48, 0], sizes = [16, 20], strides = [1, 1]} : vector<64x20xf32> to vector<16x20xf32>
    %12 = arith.maximumf %10, %11 : vector<16x20xf32>
    %13 = arith.maximumf %9, %12 : vector<16x20xf32>
    %cst_6 = arith.constant 0.000000e+00 : f32
    %14 = vector.broadcast %cst_6 : f32 to vector<16x20xf32>
    %15 = arith.maximumf %13, %14 : vector<16x20xf32>
    %c0_7 = arith.constant 0 : index
    %c0_8 = arith.constant 0 : index
    %c0_9 = arith.constant 0 : index
    %16 = vector.load %arg4[%c0_7, %c0_8, %c0_9] : memref<1x16x20xf32, #tpu.memory_space<vmem>>, vector<1x16x20xf32>
    %17 = vector.shape_cast %16 : vector<1x16x20xf32> to vector<16x20xf32>
    %18 = vector.shape_cast %15 : vector<16x20xf32> to vector<1x16x20xf32>
    tpu.vector_store %arg4[%c0_7, %c0_8, %c0_9], %18 {strides = array<i32>} : memref<1x16x20xf32, #tpu.memory_space<vmem>>, vector<1x16x20xf32>,
    return
  }
  func.func @transform_0(%arg0: i32) -> (i32, i32, i32) {
    %c0_i32 = arith.constant 0 : i32
    %c0_i32_0 = arith.constant 0 : i32
    %c0_i32_1 = arith.constant 0 : i32
    return %arg0, %c0_i32, %c0_i32_0 : i32, i32, i32
  }
  func.func @transform_1(%arg0: i32) -> (i32, i32) {
    %c0_i32 = arith.constant 0 : i32
    %c0_i32_0 = arith.constant 0 : i32
    %c0_i32_1 = arith.constant 0 : i32
    return %c0_i32, %c0_i32_0 : i32, i32
  }
  func.func @transform_2(%arg0: i32) -> (i32, i32) {
    %c0_i32 = arith.constant 0 : i32
    %c0_i32_0 = arith.constant 0 : i32
    %c0_i32_1 = arith.constant 0 : i32
    return %c0_i32, %c0_i32_0 : i32, i32
  }
  func.func @transform_3(%arg0: i32) -> (i32, i32, i32) {
    %c0_i32 = arith.constant 0 : i32
    %c0_i32_0 = arith.constant 0 : i32
    %c0_i32_1 = arith.constant 0 : i32
    return %arg0, %c0_i32, %c0_i32_0 : i32, i32, i32
  }
}

module attributes {stable_mosaic.version = 11 : i64} {
  func.func @_mlp_head_kernel(%arg0: i32, %arg1: memref<2x320xf32, #tpu.memory_space<vmem>>, %arg2: memref<320x50xf32, #tpu.memory_space<vmem>>, %arg3: memref<1x50xf32, #tpu.memory_space<vmem>>, %arg4: memref<50x10xf32, #tpu.memory_space<vmem>>, %arg5: memref<1x10xf32, #tpu.memory_space<vmem>>, %arg6: memref<2x10xf32, #tpu.memory_space<vmem>>) attributes {dimension_semantics = [#tpu.dimension_semantics<parallel>], iteration_bounds = array<i64: 1>, scalar_prefetch = 0 : i64, scratch_operands = 0 : i64, tpu.core_type = #tpu.core_type<tc>, window_params = [{transform_indices = @transform_0, window_bounds = array<i64: 2, 320>}, {pipeline_mode = #tpu.pipeline_mode<synchronous>, transform_indices = @transform_1, window_bounds = array<i64: 320, 50>}, {pipeline_mode = #tpu.pipeline_mode<synchronous>, transform_indices = @transform_2, window_bounds = array<i64: 1, 50>}, {pipeline_mode = #tpu.pipeline_mode<synchronous>, transform_indices = @transform_3, window_bounds = array<i64: 50, 10>}, {pipeline_mode = #tpu.pipeline_mode<synchronous>, transform_indices = @transform_4, window_bounds = array<i64: 1, 10>}, {transform_indices = @transform_5, window_bounds = array<i64: 2, 10>}]} {
    %c0 = arith.constant 0 : index
    %c0_0 = arith.constant 0 : index
    %0 = vector.load %arg1[%c0, %c0_0] : memref<2x320xf32, #tpu.memory_space<vmem>>, vector<2x320xf32>
    %c0_1 = arith.constant 0 : index
    %c0_2 = arith.constant 0 : index
    %1 = vector.load %arg2[%c0_1, %c0_2] : memref<320x50xf32, #tpu.memory_space<vmem>>, vector<320x50xf32>
    %cst = arith.constant dense<0.000000e+00> : vector<2x50xf32>
    %2 = tpu.matmul %0, %1, %cst {dimension_numbers = #tpu.dot_dimension_numbers<[1], [0], [0], [1], [0, 0, 1, 1], [], []>} : vector<2x320xf32>, vector<320x50xf32>, vector<2x50xf32> -> vector<2x50xf32>
    %c0_3 = arith.constant 0 : index
    %c0_4 = arith.constant 0 : index
    %3 = vector.load %arg3[%c0_3, %c0_4] : memref<1x50xf32, #tpu.memory_space<vmem>>, vector<1x50xf32>
    %4 = vector.broadcast %3 : vector<1x50xf32> to vector<2x50xf32>
    %5 = arith.addf %2, %4 : vector<2x50xf32>
    %cst_5 = arith.constant 0.000000e+00 : f32
    %6 = vector.broadcast %cst_5 : f32 to vector<2x50xf32>
    %7 = arith.maximumf %5, %6 : vector<2x50xf32>
    %c0_6 = arith.constant 0 : index
    %c0_7 = arith.constant 0 : index
    %8 = vector.load %arg4[%c0_6, %c0_7] : memref<50x10xf32, #tpu.memory_space<vmem>>, vector<50x10xf32>
    %cst_8 = arith.constant dense<0.000000e+00> : vector<2x10xf32>
    %9 = tpu.matmul %7, %8, %cst_8 {dimension_numbers = #tpu.dot_dimension_numbers<[1], [0], [0], [1], [0, 0, 1, 1], [], []>} : vector<2x50xf32>, vector<50x10xf32>, vector<2x10xf32> -> vector<2x10xf32>
    %c0_9 = arith.constant 0 : index
    %c0_10 = arith.constant 0 : index
    %10 = vector.load %arg5[%c0_9, %c0_10] : memref<1x10xf32, #tpu.memory_space<vmem>>, vector<1x10xf32>
    %11 = vector.broadcast %10 : vector<1x10xf32> to vector<2x10xf32>
    %12 = arith.addf %9, %11 : vector<2x10xf32>
    %cst_11 = arith.constant dense<0xFF800000> : vector<2xf32>
    %13 = vector.multi_reduction <maximumf>, %12, %cst_11 [1] : vector<2x10xf32> to vector<2xf32>
    %14 = vector.shape_cast %13 : vector<2xf32> to vector<2x1xf32>
    %15 = vector.broadcast %14 : vector<2x1xf32> to vector<2x10xf32>
    %16 = arith.subf %12, %15 : vector<2x10xf32>
    %17 = math.exp %16 : vector<2x10xf32>
    %cst_12 = arith.constant dense<0.000000e+00> : vector<2xf32>
    %18 = vector.multi_reduction <add>, %17, %cst_12 [1] : vector<2x10xf32> to vector<2xf32>
    %19 = vector.shape_cast %18 : vector<2xf32> to vector<2x1xf32>
    %20 = math.log %19 : vector<2x1xf32>
    %21 = vector.broadcast %20 : vector<2x1xf32> to vector<2x10xf32>
    %22 = arith.subf %16, %21 : vector<2x10xf32>
    %c0_13 = arith.constant 0 : index
    %c0_14 = arith.constant 0 : index
    %23 = vector.load %arg6[%c0_13, %c0_14] : memref<2x10xf32, #tpu.memory_space<vmem>>, vector<2x10xf32>
    tpu.vector_store %arg6[%c0_13, %c0_14], %22 {strides = array<i32>} : memref<2x10xf32, #tpu.memory_space<vmem>>, vector<2x10xf32>,
    return
  }
  func.func @transform_0(%arg0: i32) -> (i32, i32) {
    %c0_i32 = arith.constant 0 : i32
    %c0_i32_0 = arith.constant 0 : i32
    return %arg0, %c0_i32 : i32, i32
  }
  func.func @transform_1(%arg0: i32) -> (i32, i32) {
    %c0_i32 = arith.constant 0 : i32
    %c0_i32_0 = arith.constant 0 : i32
    %c0_i32_1 = arith.constant 0 : i32
    return %c0_i32, %c0_i32_0 : i32, i32
  }
  func.func @transform_2(%arg0: i32) -> (i32, i32) {
    %c0_i32 = arith.constant 0 : i32
    %c0_i32_0 = arith.constant 0 : i32
    %c0_i32_1 = arith.constant 0 : i32
    return %c0_i32, %c0_i32_0 : i32, i32
  }
  func.func @transform_3(%arg0: i32) -> (i32, i32) {
    %c0_i32 = arith.constant 0 : i32
    %c0_i32_0 = arith.constant 0 : i32
    %c0_i32_1 = arith.constant 0 : i32
    return %c0_i32, %c0_i32_0 : i32, i32
  }
  func.func @transform_4(%arg0: i32) -> (i32, i32) {
    %c0_i32 = arith.constant 0 : i32
    %c0_i32_0 = arith.constant 0 : i32
    %c0_i32_1 = arith.constant 0 : i32
    return %c0_i32, %c0_i32_0 : i32, i32
  }
  func.func @transform_5(%arg0: i32) -> (i32, i32) {
    %c0_i32 = arith.constant 0 : i32
    %c0_i32_0 = arith.constant 0 : i32
    return %arg0, %c0_i32 : i32, i32
  }
}

</mosaic_0001>

<llo_original>
// kernel: net_forward.3
$region0: #{net_forward.3}
  #allocation0 [shape = 'u32[]', space=smem, size = 0x4, offset = 0x4, fixed_abs, tag = 'smem constant byte address 0x4 - core index']
  #allocation1 [shape = 'u32[144,128]{1,0:T(1,128)}', space=vmem, size = 0x12000, scoped, tag = 'internal scratch']
  %s0 = inlined_call_operand.vmem [shape: f32[2,576,25], index: 0, kind: input, shape index: {}]
  %s1 = inlined_call_operand.vmem [shape: f32[25,10], index: 1, kind: input, shape index: {}]
  %s2 = inlined_call_operand.vmem [shape: f32[1,10], index: 2, kind: input, shape index: {}]
  %s3 = inlined_call_operand.vmem [shape: f32[2,144,10], index: 3, kind: output, shape index: {}]
  %s4 = sld [smem:[#allocation0]]
  $region45: #{net_forward.3} parent=0
    _
  %s6 = ssub.s32 1, %s4
  %s7 = scalar_select 0, %s6, %s4
  loop: start=0, step=1, limit=4
  $region2: #{net_forward.3} parent=0 // loop_pre_header
    _
  $region3: #{net_forward.3} parent=0 // loop_header
    %s9 = sphi 0, %s13
    %p10 = scmp.ge.s32.totalorder %s9, 4
    %s19 = sphi 0, %s21
    %s22 = sphi 0, %s19
    %s23 = sphi 0, %s22
    %s39 = sphi 0, %s23
    %s43 = sphi 0, %s43
    %s45 = sphi 0, %s43
    %s46 = sphi 0, %s45
    %s60 = sphi 0, %s46
    %s64 = sphi 0, %s64
    %s66 = sphi 0, %s64
    %s67 = sphi 0, %s66
    %s81 = sphi 0, %s67
    %s87 = sphi 0, %s89
    %s90 = sphi 0, %s87
    %s91 = sphi 0, %s90
    %s107 = sphi 0, %s91
  $region4: #{net_forward.3} parent=0 // loop_header_branch
    %12 = sbr.rel (%p10) target = $region8
  $region5: #{net_forward.3} parent=0 // loop_body
    %s14 = ssub.s32 %s9, 1
    %s15 = ssub.s32 %s9, 2
    %s16 = sadd.s32 %s9, 1
    %s17 = ssub.s32 %s9, %s16
    %p18 = scmp.eq.s32.totalorder %s17, 0
    %s20 = sadd.s32 %s19, 1
    %s21 = scalar_select %p18, %s19, %s20
    %p24 = pneg %p18
    %p25 = scmp.eq.s32.totalorder %s9, 1
    %p26 = por %p24, %p25
    %p27 = scmp.ne.s32.totalorder %s19, %s22
    %p28 = scmp.eq.s32.totalorder %s9, 0
    %p29 = por %p27, %p28
    %p30 = scmp.ne.s32.totalorder %s19, %s22
    %p31 = scmp.eq.s32.totalorder %s14, 1
    %p32 = por %p30, %p31
    %p33 = scmp.ne.s32.totalorder %s22, %s23
    %p34 = scmp.eq.s32.totalorder %s14, 0
    %p35 = por %p33, %p34
    %p36 = scmp.ne.s32.totalorder %s22, %s23
    %p37 = scmp.eq.s32.totalorder %s15, 1
    %p38 = por %p36, %p37
    %p40 = scmp.ne.s32.totalorder %s23, %s39
    %p41 = scmp.eq.s32.totalorder %s15, 0
    %p42 = por %p40, %p41
    %s44 = sadd.s32 %s43, 1
    %p47 = scmp.eq.s32.totalorder %s9, 1
    %p48 = scmp.ne.s32.totalorder %s43, %s45
    %p49 = scmp.eq.s32.totalorder %s9, 0
    %p50 = por %p48, %p49
    %p51 = scmp.ne.s32.totalorder %s43, %s45
    %p52 = scmp.eq.s32.totalorder %s14, 1
    %p53 = por %p51, %p52
    %p54 = scmp.ne.s32.totalorder %s45, %s46
    %p55 = scmp.eq.s32.totalorder %s14, 0
    %p56 = por %p54, %p55
    %p57 = scmp.ne.s32.totalorder %s45, %s46
    %p58 = scmp.eq.s32.totalorder %s15, 1
    %p59 = por %p57, %p58
    %p61 = scmp.ne.s32.totalorder %s46, %s60
    %p62 = scmp.eq.s32.totalorder %s15, 0
    %p63 = por %p61, %p62
    %s65 = sadd.s32 %s64, 1
    %p68 = scmp.eq.s32.totalorder %s9, 1
    %p69 = scmp.ne.s32.totalorder %s64, %s66
    %p70 = scmp.eq.s32.totalorder %s9, 0
    %p71 = por %p69, %p70
    %p72 = scmp.ne.s32.totalorder %s64, %s66
    %p73 = scmp.eq.s32.totalorder %s14, 1
    %p74 = por %p72, %p73
    %p75 = scmp.ne.s32.totalorder %s66, %s67
    %p76 = scmp.eq.s32.totalorder %s14, 0
    %p77 = por %p75, %p76
    %p78 = scmp.ne.s32.totalorder %s66, %s67
    %p79 = scmp.eq.s32.totalorder %s15, 1
    %p80 = por %p78, %p79
    %p82 = scmp.ne.s32.totalorder %s67, %s81
    %p83 = scmp.eq.s32.totalorder %s15, 0
    %p84 = por %p82, %p83
    %s85 = ssub.s32 %s9, %s16
    %p86 = scmp.eq.s32.totalorder %s85, 0
    %s88 = sadd.s32 %s87, 1
    %s89 = scalar_select %p86, %s87, %s88
    %p92 = pneg %p86
    %p93 = scmp.eq.s32.totalorder %s9, 1
    %p94 = por %p92, %p93
    %p95 = scmp.ne.s32.totalorder %s87, %s90
    %p96 = scmp.eq.s32.totalorder %s9, 0
    %p97 = por %p95, %p96
    %p98 = scmp.ne.s32.totalorder %s87, %s90
    %p99 = scmp.eq.s32.totalorder %s14, 1
    %p100 = por %p98, %p99
    %p101 = scmp.ne.s32.totalorder %s90, %s91
    %p102 = scmp.eq.s32.totalorder %s14, 0
    %p103 = por %p101, %p102
    %p104 = scmp.ne.s32.totalorder %s90, %s91
    %p105 = scmp.eq.s32.totalorder %s15, 1
    %p106 = por %p104, %p105
    %p108 = scmp.ne.s32.totalorder %s91, %s107
    %p109 = scmp.eq.s32.totalorder %s15, 0
    %p110 = por %p108, %p109
    %p111 = scmp.le.s32.totalorder 1, %s9
    %p112 = scmp.lt.s32.totalorder %s9, 3
    %p113 = pnand %p111, %p112
    %p114 = pneg %p113
    // Predicated region
    $region9: #{net_forward.3} parent=5 // pred_check
      _
    $region10: #{net_forward.3} parent=5 // pred_check_branch
      %116 = sbr.rel (%p113) target = $region12
    $region11: #{net_forward.3} parent=5 // pred_region
      %s117 = ssub.s32 %s9, 1
      // Predicated region
      $region13: #{net_forward.3} parent=11 // pred_check
        %p118 = pneg %p56
      $region14: #{net_forward.3} parent=11 // pred_check_branch
        %120 = sbr.rel (%p118) target = $region16
      $region15: #{net_forward.3} parent=11 // pred_region
        _
      $region16: #{net_forward.3} parent=11 // pred_fallthru
        _
      // Predicated region
      $region17: #{net_forward.3} parent=11 // pred_check
        %p121 = pneg %p77
      $region18: #{net_forward.3} parent=11 // pred_check_branch
        %123 = sbr.rel (%p121) target = $region20
      $region19: #{net_forward.3} parent=11 // pred_region
        _
      $region20: #{net_forward.3} parent=11 // pred_fallthru
        _
    $region12: #{net_forward.3} parent=5 // pred_fallthru
      _
    %p124 = scmp.lt.s32.totalorder %s9, 2
    // Predicated region
    $region21: #{net_forward.3} parent=5 // pred_check
      %p125 = pneg %p124
    $region22: #{net_forward.3} parent=5 // pred_check_branch
      %127 = sbr.rel (%p125) target = $region24
    $region23: #{net_forward.3} parent=5 // pred_region
      // Predicated region
      $region25: #{net_forward.3} parent=23 // pred_check
        %p128 = pneg %p29
      $region26: #{net_forward.3} parent=23 // pred_check_branch
        %130 = sbr.rel (%p128) target = $region28
      $region27: #{net_forward.3} parent=23 // pred_region
        %p131 = scmp.lt.s32.totalorder %s9, 1
        %s132 = scalar_select %p131, %s9, 1
        %s133 = smul.addr %s132, 72
        %s134 = smul.addr %s133, 8
        %s135 = scalar_lea.vmem %s0, %s134
      $region28: #{net_forward.3} parent=23 // pred_fallthru
        _
    $region24: #{net_forward.3} parent=5 // pred_fallthru
      _
    %p136 = scmp.le.s32.totalorder 1, %s9
    %p137 = scmp.lt.s32.totalorder %s9, 3
    %p138 = pnand %p136, %p137
    %p139 = pneg %p138
    // Predicated region
    $region29: #{net_forward.3} parent=5 // pred_check
      _
    $region30: #{net_forward.3} parent=5 // pred_check_branch
      %141 = sbr.rel (%p138) target = $region32
    $region31: #{net_forward.3} parent=5 // pred_region
      %s142 = ssub.s32 %s9, 1
      %p143 = scmp.lt.s32.totalorder %s14, 1
      %s144 = scalar_select %p143, %s14, 1
      %s145 = smul.addr %s144, 72
      %s146 = smul.addr %s145, 8
      %s147 = scalar_lea.vmem %s0, %s146
      %p148 = pneg %p35
      %p149 = pneg %p32
      %p150 = pneg %p56
      %p151 = pneg %p53
      %p152 = pneg %p77
      %p153 = pneg %p74
      %p154 = pneg %p103
      %p155 = pneg %p100
      %p156 = scmp.lt.s32.totalorder %s14, 1
      %s157 = scalar_select %p156, %s14, 1
      %s158 = smul.addr %s157, 18
      %s159 = smul.addr %s158, 8
      %s160 = scalar_lea.vmem %s3, %s159
      %p161 = scmp.lt.s32.totalorder %s14, 1
      %s162 = scalar_select %p161, %s14, 1
      %s163 = smul.addr %s162, 72
      %s164 = smul.addr %s163, 8
      %s165 = scalar_lea.vmem %s0, %s164
      %p166 = scmp.lt.s32.totalorder %s14, 1
      %s167 = scalar_select %p166, %s14, 1
      %s168 = smul.addr %s167, 18
      %s169 = smul.addr %s168, 8
      %s170 = scalar_lea.vmem %s3, %s169
      %v171 = vld [vmem:[%s165] sm:$0xff]
      %v172 = vld [vmem:[%s165 + $0x8] sm:$0xff]
      %v173 = vld [vmem:[%s165 + $0x10] sm:$0xff]
      %v174 = vld [vmem:[%s165 + $0x18] sm:$0xff]
      %v175 = vld [vmem:[%s165 + $0x20] sm:$0xff]
      %v176 = vld [vmem:[%s165 + $0x28] sm:$0xff]
      %v177 = vld [vmem:[%s165 + $0x30] sm:$0xff]
      %v178 = vld [vmem:[%s165 + $0x38] sm:$0xff]
      %v179 = vld [vmem:[%s165 + $0x40] sm:$0xff]
      %v180 = vld [vmem:[%s165 + $0x48] sm:$0xff]
      %v181 = vld [vmem:[%s165 + $0x50] sm:$0xff]
      %v182 = vld [vmem:[%s165 + $0x58] sm:$0xff]
      %v183 = vld [vmem:[%s165 + $0x60] sm:$0xff]
      %v184 = vld [vmem:[%s165 + $0x68] sm:$0xff]
      %v185 = vld [vmem:[%s165 + $0x70] sm:$0xff]
      %v186 = vld [vmem:[%s165 + $0x78] sm:$0xff]
      %v187 = vld [vmem:[%s165 + $0x80] sm:$0xff]
      %v188 = vld [vmem:[%s165 + $0x88] sm:$0xff]
      %v189 = vld [vmem:[%s165 + $0x90] sm:$0xff]
      %v190 = vld [vmem:[%s165 + $0x98] sm:$0xff]
      %v191 = vld [vmem:[%s165 + $0xa0] sm:$0xff]
      %v192 = vld [vmem:[%s165 + $0xa8] sm:$0xff]
      %v193 = vld [vmem:[%s165 + $0xb0] sm:$0xff]
      %v194 = vld [vmem:[%s165 + $0xb8] sm:$0xff]
      %v195 = vld [vmem:[%s165 + $0xc0] sm:$0xff]
      %v196 = vld [vmem:[%s165 + $0xc8] sm:$0xff]
      %v197 = vld [vmem:[%s165 + $0xd0] sm:$0xff]
      %v198 = vld [vmem:[%s165 + $0xd8] sm:$0xff]
      %v199 = vld [vmem:[%s165 + $0xe0] sm:$0xff]
      %v200 = vld [vmem:[%s165 + $0xe8] sm:$0xff]
      %v201 = vld [vmem:[%s165 + $0xf0] sm:$0xff]
      %v202 = vld [vmem:[%s165 + $0xf8] sm:$0xff]
      %v203 = vld [vmem:[%s165 + $0x100] sm:$0xff]
      %v204 = vld [vmem:[%s165 + $0x108] sm:$0xff]
      %v205 = vld [vmem:[%s165 + $0x110] sm:$0xff]
      %v206 = vld [vmem:[%s165 + $0x118] sm:$0xff]
      %v207 = vld [vmem:[%s165 + $0x120] sm:$0xff]
      %v208 = vld [vmem:[%s165 + $0x128] sm:$0xff]
      %v209 = vld [vmem:[%s165 + $0x130] sm:$0xff]
      %v210 = vld [vmem:[%s165 + $0x138] sm:$0xff]
      %v211 = vld [vmem:[%s165 + $0x140] sm:$0xff]
      %v212 = vld [vmem:[%s165 + $0x148] sm:$0xff]
      %v213 = vld [vmem:[%s165 + $0x150] sm:$0xff]
      %v214 = vld [vmem:[%s165 + $0x158] sm:$0xff]
      %v215 = vld [vmem:[%s165 + $0x160] sm:$0xff]
      %v216 = vld [vmem:[%s165 + $0x168] sm:$0xff]
      %v217 = vld [vmem:[%s165 + $0x170] sm:$0xff]
      %v218 = vld [vmem:[%s165 + $0x178] sm:$0xff]
      %v219 = vld [vmem:[%s165 + $0x180] sm:$0xff]
      %v220 = vld [vmem:[%s165 + $0x188] sm:$0xff]
      %v221 = vld [vmem:[%s165 + $0x190] sm:$0xff]
      %v222 = vld [vmem:[%s165 + $0x198] sm:$0xff]
      %v223 = vld [vmem:[%s165 + $0x1a0] sm:$0xff]
      %v224 = vld [vmem:[%s165 + $0x1a8] sm:$0xff]
      %v225 = vld [vmem:[%s165 + $0x1b0] sm:$0xff]
      %v226 = vld [vmem:[%s165 + $0x1b8] sm:$0xff]
      %v227 = vld [vmem:[%s165 + $0x1c0] sm:$0xff]
      %v228 = vld [vmem:[%s165 + $0x1c8] sm:$0xff]
      %v229 = vld [vmem:[%s165 + $0x1d0] sm:$0xff]
      %v230 = vld [vmem:[%s165 + $0x1d8] sm:$0xff]
      %v231 = vld [vmem:[%s165 + $0x1e0] sm:$0xff]
      %v232 = vld [vmem:[%s165 + $0x1e8] sm:$0xff]
      %v233 = vld [vmem:[%s165 + $0x1f0] sm:$0xff]
      %v234 = vld [vmem:[%s165 + $0x1f8] sm:$0xff]
      %v235 = vld [vmem:[%s165 + $0x200] sm:$0xff]
      %v236 = vld [vmem:[%s165 + $0x208] sm:$0xff]
      %v237 = vld [vmem:[%s165 + $0x210] sm:$0xff]
      %v238 = vld [vmem:[%s165 + $0x218] sm:$0xff]
      %v239 = vld [vmem:[%s165 + $0x220] sm:$0xff]
      %v240 = vld [vmem:[%s165 + $0x228] sm:$0xff]
      %v241 = vld [vmem:[%s165 + $0x230] sm:$0xff]
      %v242 = vld [vmem:[%s165 + $0x238] sm:$0xff]
      %v243 = vld [vmem:[%s1] sm:$0xff]
      %v244 = vld [vmem:[%s1 + $0x8] sm:$0xff]
      %v245 = vld [vmem:[%s1 + $0x10] sm:$0xff]
      %v246 = vld [vmem:[%s1 + $0x18] sm:$0x1]
      %v247 = vld [vmem:[%s2] sm:$0x1]
      %v249 = vlaneseq
      %v250 = vshrl.u32 %v249, 7
      %v251 = vsub.s32 0, %v250
      %v252 = vrot.slane %v247, %v251
      %vm254 = vcmask 203776
      %v256 = vsel %vm254, %v171, 0
      %v259 = vsel %vm254, %v172, 0
      %v262 = vsel %vm254, %v173, 0
      %v265 = vsel %vm254, %v174, 0
      %v268 = vsel %vm254, %v175, 0
      %v271 = vsel %vm254, %v176, 0
      %v274 = vsel %vm254, %v177, 0
      %v277 = vsel %vm254, %v178, 0
      %v280 = vsel %vm254, %v179, 0
      %v283 = vsel %vm254, %v180, 0
      %v286 = vsel %vm254, %v181, 0
      %v289 = vsel %vm254, %v182, 0
      %v292 = vsel %vm254, %v183, 0
      %v295 = vsel %vm254, %v184, 0
      %v298 = vsel %vm254, %v185, 0
      %v301 = vsel %vm254, %v186, 0
      %v304 = vsel %vm254, %v187, 0
      %v307 = vsel %vm254, %v188, 0
      %v310 = vsel %vm254, %v189, 0
      %v313 = vsel %vm254, %v190, 0
      %v316 = vsel %vm254, %v191, 0
      %v319 = vsel %vm254, %v192, 0
      %v322 = vsel %vm254, %v193, 0
      %v325 = vsel %vm254, %v194, 0
      %v328 = vsel %vm254, %v195, 0
      %v331 = vsel %vm254, %v196, 0
      %v334 = vsel %vm254, %v197, 0
      %v337 = vsel %vm254, %v198, 0
      %v340 = vsel %vm254, %v199, 0
      %v343 = vsel %vm254, %v200, 0
      %v346 = vsel %vm254, %v201, 0
      %v349 = vsel %vm254, %v202, 0
      %v352 = vsel %vm254, %v203, 0
      %v355 = vsel %vm254, %v204, 0
      %v358 = vsel %vm254, %v205, 0
      %v361 = vsel %vm254, %v206, 0
      %v364 = vsel %vm254, %v207, 0
      %v367 = vsel %vm254, %v208, 0
      %v370 = vsel %vm254, %v209, 0
      %v373 = vsel %vm254, %v210, 0
      %v376 = vsel %vm254, %v211, 0
      %v379 = vsel %vm254, %v212, 0
      %v382 = vsel %vm254, %v213, 0
      %v385 = vsel %vm254, %v214, 0
      %v388 = vsel %vm254, %v215, 0
      %v391 = vsel %vm254, %v216, 0
      %v394 = vsel %vm254, %v217, 0
      %v397 = vsel %vm254, %v218, 0
      %v400 = vsel %vm254, %v219, 0
      %v403 = vsel %vm254, %v220, 0
      %v406 = vsel %vm254, %v221, 0
      %v409 = vsel %vm254, %v222, 0
      %v412 = vsel %vm254, %v223, 0
      %v415 = vsel %vm254, %v224, 0
      %v418 = vsel %vm254, %v225, 0
      %v421 = vsel %vm254, %v226, 0
      %v424 = vsel %vm254, %v227, 0
      %v427 = vsel %vm254, %v228, 0
      %v430 = vsel %vm254, %v229, 0
      %v433 = vsel %vm254, %v230, 0
      %v436 = vsel %vm254, %v231, 0
      %v439 = vsel %vm254, %v232, 0
      %v442 = vsel %vm254, %v233, 0
      %v445 = vsel %vm254, %v234, 0
      %v448 = vsel %vm254, %v235, 0
      %v451 = vsel %vm254, %v236, 0
      %v454 = vsel %vm254, %v237, 0
      %v457 = vsel %vm254, %v238, 0
      %v460 = vsel %vm254, %v239, 0
      %v463 = vsel %vm254, %v240, 0
      %v466 = vsel %vm254, %v241, 0
      %v469 = vsel %vm254, %v242, 0
      %vm471 = vcmask 1040384
      %v473 = vsel %vm471, %v246, 0
      %475 = vmatprep.subr.mxu0 0.0
      %476 = vmatpush1.msra.mxu0 0.0
      %477 = vmatprep.subr.mxu0 0.0
      %478 = vmatpush1.msra.mxu0 0.0
      %479 = vmatprep.subr.mxu0 0.0
      %480 = vmatpush1.msra.mxu0 0.0
      %481 = vmatprep.subr.mxu0 0.0
      %482 = vmatpush1.msra.mxu0 0.0
      %483 = vmatprep.subr.mxu0 0.0
      %484 = vmatpush1.msra.mxu0 0.0
      %485 = vmatprep.subr.mxu0 0.0
      %486 = vmatpush1.msra.mxu0 0.0
      %487 = vmatprep.subr.mxu0 0.0
      %488 = vmatpush1.msra.mxu0 0.0
      %489 = vmatprep.subr.mxu0 0.0
      %490 = vmatpush1.msra.mxu0 0.0
      %491 = vmatprep.subr.mxu0 0.0
      %492 = vmatpush1.msra.mxu0 0.0
      %493 = vmatprep.subr.mxu0 0.0
      %494 = vmatpush1.msra.mxu0 0.0
      %495 = vmatprep.subr.mxu0 0.0
      %496 = vmatpush1.msra.mxu0 0.0
      %497 = vmatprep.subr.mxu0 0.0
      %498 = vmatpush1.msra.mxu0 0.0
      %499 = vmatprep.subr.mxu0 0.0
      %500 = vmatpush1.msra.mxu0 %v473
      %501 = vmatprep.subr.mxu0 0.0
      %502 = vmatpush1.msra.mxu0 %v245
      %503 = vmatprep.subr.mxu0 0.0
      %504 = vmatpush1.msra.mxu0 %v244
      %505 = vmatprep.subr.mxu0 0.0
      %506 = vmatpush1.msra.mxu0 %v243
      %507 = vmatprep.subr.mxu0 0.0
      %508 = vmatpush2.msra.mxu0 0.0
      %509 = vmatprep.subr.mxu0 0.0
      %510 = vmatpush2.msra.mxu0 0.0
      %511 = vmatprep.subr.mxu0 0.0
      %512 = vmatpush2.msra.mxu0 0.0
      %513 = vmatprep.subr.mxu0 0.0
      %514 = vmatpush2.msra.mxu0 0.0
      %515 = vmatprep.subr.mxu0 0.0
      %516 = vmatpush2.msra.mxu0 0.0
      %517 = vmatprep.subr.mxu0 0.0
      %518 = vmatpush2.msra.mxu0 0.0
      %519 = vmatprep.subr.mxu0 0.0
      %520 = vmatpush2.msra.mxu0 0.0
      %521 = vmatprep.subr.mxu0 0.0
      %522 = vmatpush2.msra.mxu0 0.0
      %523 = vmatprep.subr.mxu0 0.0
      %524 = vmatpush2.msra.mxu0 0.0
      %525 = vmatprep.subr.mxu0 0.0
      %526 = vmatpush2.msra.mxu0 0.0
      %527 = vmatprep.subr.mxu0 0.0
      %528 = vmatpush2.msra.mxu0 0.0
      %529 = vmatprep.subr.mxu0 0.0
      %530 = vmatpush2.msra.mxu0 0.0
      %531 = vmatprep.subr.mxu0 0.0
      %532 = vmatpush2.msra.mxu0 0.0
      %533 = vmatprep.subr.mxu0 0.0
      %534 = vmatpush2.msra.mxu0 0.0
      %535 = vmatprep.subr.mxu0 0.0
      %536 = vmatpush2.msra.mxu0 0.0
      %537 = vmatprep.subr.mxu0 0.0
      %538 = vmatpush2.msra.mxu0 0.0
      %539 = vmatprep.mubr.f32.mxu0 0.0
      %540 = vmatmul.mubr.f32.gmra.mxu0 %v256
      %v541 = vpop.f32.mrf.mxu0
      %v542 = vadd.f32 %v252, %v541
      %v543 = vpop.f32.mrf.mxu0
      %544 = vmatprep.mubr.f32.mxu0 0.0
      %545 = vmatmul.mubr.f32.gmra.mxu0 %v259
      %v546 = vpop.f32.mrf.mxu0
      %v547 = vadd.f32 %v252, %v546
      %v548 = vpop.f32.mrf.mxu0
      %549 = vmatprep.mubr.f32.mxu0 0.0
      %550 = vmatmul.mubr.f32.gmra.mxu0 %v262
      %v551 = vpop.f32.mrf.mxu0
      %v552 = vadd.f32 %v252, %v551
      %v553 = vpop.f32.mrf.mxu0
      %554 = vmatprep.mubr.f32.mxu0 0.0
      %555 = vmatmul.mubr.f32.gmra.mxu0 %v265
      %v556 = vpop.f32.mrf.mxu0
      %v557 = vadd.f32 %v252, %v556
      %v558 = vpop.f32.mrf.mxu0
      %559 = vmatprep.mubr.f32.mxu0 0.0
      %560 = vmatmul.mubr.f32.gmra.mxu0 %v268
      %v561 = vpop.f32.mrf.mxu0
      %v562 = vadd.f32 %v252, %v561
      %v563 = vpop.f32.mrf.mxu0
      %564 = vmatprep.mubr.f32.mxu0 0.0
      %565 = vmatmul.mubr.f32.gmra.mxu0 %v271
      %v566 = vpop.f32.mrf.mxu0
      %v567 = vadd.f32 %v252, %v566
      %v568 = vpop.f32.mrf.mxu0
      %569 = vmatprep.mubr.f32.mxu0 0.0
      %570 = vmatmul.mubr.f32.gmra.mxu0 %v274
      %v571 = vpop.f32.mrf.mxu0
      %v572 = vadd.f32 %v252, %v571
      %v573 = vpop.f32.mrf.mxu0
      %574 = vmatprep.mubr.f32.mxu0 0.0
      %575 = vmatmul.mubr.f32.gmra.mxu0 %v277
      %v576 = vpop.f32.mrf.mxu0
      %v577 = vadd.f32 %v252, %v576
      %v578 = vpop.f32.mrf.mxu0
      %579 = vmatprep.mubr.f32.mxu0 0.0
      %580 = vmatmul.mubr.f32.gmra.mxu0 %v280
      %v581 = vpop.f32.mrf.mxu0
      %v582 = vadd.f32 %v252, %v581
      %v583 = vpop.f32.mrf.mxu0
      %584 = vmatprep.mubr.f32.mxu0 0.0
      %585 = vmatmul.mubr.f32.gmra.mxu0 %v283
      %v586 = vpop.f32.mrf.mxu0
      %v587 = vadd.f32 %v252, %v586
      %v588 = vpop.f32.mrf.mxu0
      %589 = vmatprep.mubr.f32.mxu0 0.0
      %590 = vmatmul.mubr.f32.gmra.mxu0 %v286
      %v591 = vpop.f32.mrf.mxu0
      %v592 = vadd.f32 %v252, %v591
      %v593 = vpop.f32.mrf.mxu0
      %594 = vmatprep.mubr.f32.mxu0 0.0
      %595 = vmatmul.mubr.f32.gmra.mxu0 %v289
      %v596 = vpop.f32.mrf.mxu0
      %v597 = vadd.f32 %v252, %v596
      %v598 = vpop.f32.mrf.mxu0
      %599 = vmatprep.mubr.f32.mxu0 0.0
      %600 = vmatmul.mubr.f32.gmra.mxu0 %v292
      %v601 = vpop.f32.mrf.mxu0
      %v602 = vadd.f32 %v252, %v601
      %v603 = vpop.f32.mrf.mxu0
      %604 = vmatprep.mubr.f32.mxu0 0.0
      %605 = vmatmul.mubr.f32.gmra.mxu0 %v295
      %v606 = vpop.f32.mrf.mxu0
      %v607 = vadd.f32 %v252, %v606
      %v608 = vpop.f32.mrf.mxu0
      %609 = vmatprep.mubr.f32.mxu0 0.0
      %610 = vmatmul.mubr.f32.gmra.mxu0 %v298
      %v611 = vpop.f32.mrf.mxu0
      %v612 = vadd.f32 %v252, %v611
      %v613 = vpop.f32.mrf.mxu0
      %614 = vmatprep.mubr.f32.mxu0 0.0
      %615 = vmatmul.mubr.f32.gmra.mxu0 %v301
      %v616 = vpop.f32.mrf.mxu0
      %v617 = vadd.f32 %v252, %v616
      %v618 = vpop.f32.mrf.mxu0
      %619 = vmatprep.mubr.f32.mxu0 0.0
      %620 = vmatmul.mubr.f32.gmra.mxu0 %v304
      %v621 = vpop.f32.mrf.mxu0
      %v622 = vadd.f32 %v252, %v621
      %v623 = vpop.f32.mrf.mxu0
      %624 = vmatprep.mubr.f32.mxu0 0.0
      %625 = vmatmul.mubr.f32.gmra.mxu0 %v307
      %v626 = vpop.f32.mrf.mxu0
      %v627 = vadd.f32 %v252, %v626
      %v628 = vpop.f32.mrf.mxu0
      %629 = vmatprep.mubr.f32.mxu0 0.0
      %630 = vmatmul.mubr.f32.gmra.mxu0 %v310
      %v631 = vpop.f32.mrf.mxu0
      %v632 = vadd.f32 %v252, %v631
      %v633 = vpop.f32.mrf.mxu0
      %634 = vmatprep.mubr.f32.mxu0 0.0
      %635 = vmatmul.mubr.f32.gmra.mxu0 %v313
      %v636 = vpop.f32.mrf.mxu0
      %v637 = vadd.f32 %v252, %v636
      %v638 = vpop.f32.mrf.mxu0
      %639 = vmatprep.mubr.f32.mxu0 0.0
      %640 = vmatmul.mubr.f32.gmra.mxu0 %v316
      %v641 = vpop.f32.mrf.mxu0
      %v642 = vadd.f32 %v252, %v641
      %v643 = vpop.f32.mrf.mxu0
      %644 = vmatprep.mubr.f32.mxu0 0.0
      %645 = vmatmul.mubr.f32.gmra.mxu0 %v319
      %v646 = vpop.f32.mrf.mxu0
      %v647 = vadd.f32 %v252, %v646
      %v648 = vpop.f32.mrf.mxu0
      %649 = vmatprep.mubr.f32.mxu0 0.0
      %650 = vmatmul.mubr.f32.gmra.mxu0 %v322
      %v651 = vpop.f32.mrf.mxu0
      %v652 = vadd.f32 %v252, %v651
      %v653 = vpop.f32.mrf.mxu0
      %654 = vmatprep.mubr.f32.mxu0 0.0
      %655 = vmatmul.mubr.f32.gmra.mxu0 %v325
      %v656 = vpop.f32.mrf.mxu0
      %v657 = vadd.f32 %v252, %v656
      %v658 = vpop.f32.mrf.mxu0
      %659 = vmatprep.mubr.f32.mxu0 0.0
      %660 = vmatmul.mubr.f32.gmra.mxu0 %v328
      %v661 = vpop.f32.mrf.mxu0
      %v662 = vadd.f32 %v252, %v661
      %v663 = vpop.f32.mrf.mxu0
      %664 = vmatprep.mubr.f32.mxu0 0.0
      %665 = vmatmul.mubr.f32.gmra.mxu0 %v331
      %v666 = vpop.f32.mrf.mxu0
      %v667 = vadd.f32 %v252, %v666
      %v668 = vpop.f32.mrf.mxu0
      %669 = vmatprep.mubr.f32.mxu0 0.0
      %670 = vmatmul.mubr.f32.gmra.mxu0 %v334
      %v671 = vpop.f32.mrf.mxu0
      %v672 = vadd.f32 %v252, %v671
      %v673 = vpop.f32.mrf.mxu0
      %674 = vmatprep.mubr.f32.mxu0 0.0
      %675 = vmatmul.mubr.f32.gmra.mxu0 %v337
      %v676 = vpop.f32.mrf.mxu0
      %v677 = vadd.f32 %v252, %v676
      %v678 = vpop.f32.mrf.mxu0
      %679 = vmatprep.mubr.f32.mxu0 0.0
      %680 = vmatmul.mubr.f32.gmra.mxu0 %v340
      %v681 = vpop.f32.mrf.mxu0
      %v682 = vadd.f32 %v252, %v681
      %v683 = vpop.f32.mrf.mxu0
      %684 = vmatprep.mubr.f32.mxu0 0.0
      %685 = vmatmul.mubr.f32.gmra.mxu0 %v343
      %v686 = vpop.f32.mrf.mxu0
      %v687 = vadd.f32 %v252, %v686
      %v688 = vpop.f32.mrf.mxu0
      %689 = vmatprep.mubr.f32.mxu0 0.0
      %690 = vmatmul.mubr.f32.gmra.mxu0 %v346
      %v691 = vpop.f32.mrf.mxu0
      %v692 = vadd.f32 %v252, %v691
      %v693 = vpop.f32.mrf.mxu0
      %694 = vmatprep.mubr.f32.mxu0 0.0
      %695 = vmatmul.mubr.f32.gmra.mxu0 %v349
      %v696 = vpop.f32.mrf.mxu0
      %v697 = vadd.f32 %v252, %v696
      %v698 = vpop.f32.mrf.mxu0
      %699 = vmatprep.mubr.f32.mxu0 0.0
      %700 = vmatmul.mubr.f32.gmra.mxu0 %v352
      %v701 = vpop.f32.mrf.mxu0
      %v702 = vadd.f32 %v252, %v701
      %v703 = vpop.f32.mrf.mxu0
      %704 = vmatprep.mubr.f32.mxu0 0.0
      %705 = vmatmul.mubr.f32.gmra.mxu0 %v355
      %v706 = vpop.f32.mrf.mxu0
      %v707 = vadd.f32 %v252, %v706
      %v708 = vpop.f32.mrf.mxu0
      %709 = vmatprep.mubr.f32.mxu0 0.0
      %710 = vmatmul.mubr.f32.gmra.mxu0 %v358
      %v711 = vpop.f32.mrf.mxu0
      %v712 = vadd.f32 %v252, %v711
      %v713 = vpop.f32.mrf.mxu0
      %714 = vmatprep.mubr.f32.mxu0 0.0
      %715 = vmatmul.mubr.f32.gmra.mxu0 %v361
      %v716 = vpop.f32.mrf.mxu0
      %v717 = vadd.f32 %v252, %v716
      %v718 = vpop.f32.mrf.mxu0
      %719 = vmatprep.mubr.f32.mxu0 0.0
      %720 = vmatmul.mubr.f32.gmra.mxu0 %v364
      %v721 = vpop.f32.mrf.mxu0
      %v722 = vadd.f32 %v252, %v721
      %v723 = vpop.f32.mrf.mxu0
      %724 = vmatprep.mubr.f32.mxu0 0.0
      %725 = vmatmul.mubr.f32.gmra.mxu0 %v367
      %v726 = vpop.f32.mrf.mxu0
      %v727 = vadd.f32 %v252, %v726
      %v728 = vpop.f32.mrf.mxu0
      %729 = vmatprep.mubr.f32.mxu0 0.0
      %730 = vmatmul.mubr.f32.gmra.mxu0 %v370
      %v731 = vpop.f32.mrf.mxu0
      %v732 = vadd.f32 %v252, %v731
      %v733 = vpop.f32.mrf.mxu0
      %734 = vmatprep.mubr.f32.mxu0 0.0
      %735 = vmatmul.mubr.f32.gmra.mxu0 %v373
      %v736 = vpop.f32.mrf.mxu0
      %v737 = vadd.f32 %v252, %v736
      %v738 = vpop.f32.mrf.mxu0
      %739 = vmatprep.mubr.f32.mxu0 0.0
      %740 = vmatmul.mubr.f32.gmra.mxu0 %v376
      %v741 = vpop.f32.mrf.mxu0
      %v742 = vadd.f32 %v252, %v741
      %v743 = vpop.f32.mrf.mxu0
      %744 = vmatprep.mubr.f32.mxu0 0.0
      %745 = vmatmul.mubr.f32.gmra.mxu0 %v379
      %v746 = vpop.f32.mrf.mxu0
      %v747 = vadd.f32 %v252, %v746
      %v748 = vpop.f32.mrf.mxu0
      %749 = vmatprep.mubr.f32.mxu0 0.0
      %750 = vmatmul.mubr.f32.gmra.mxu0 %v382
      %v751 = vpop.f32.mrf.mxu0
      %v752 = vadd.f32 %v252, %v751
      %v753 = vpop.f32.mrf.mxu0
      %754 = vmatprep.mubr.f32.mxu0 0.0
      %755 = vmatmul.mubr.f32.gmra.mxu0 %v385
      %v756 = vpop.f32.mrf.mxu0
      %v757 = vadd.f32 %v252, %v756
      %v758 = vpop.f32.mrf.mxu0
      %759 = vmatprep.mubr.f32.mxu0 0.0
      %760 = vmatmul.mubr.f32.gmra.mxu0 %v388
      %v761 = vpop.f32.mrf.mxu0
      %v762 = vadd.f32 %v252, %v761
      %v763 = vpop.f32.mrf.mxu0
      %764 = vmatprep.mubr.f32.mxu0 0.0
      %765 = vmatmul.mubr.f32.gmra.mxu0 %v391
      %v766 = vpop.f32.mrf.mxu0
      %v767 = vadd.f32 %v252, %v766
      %v768 = vpop.f32.mrf.mxu0
      %769 = vmatprep.mubr.f32.mxu0 0.0
      %770 = vmatmul.mubr.f32.gmra.mxu0 %v394
      %v771 = vpop.f32.mrf.mxu0
      %v772 = vadd.f32 %v252, %v771
      %v773 = vpop.f32.mrf.mxu0
      %774 = vmatprep.mubr.f32.mxu0 0.0
      %775 = vmatmul.mubr.f32.gmra.mxu0 %v397
      %v776 = vpop.f32.mrf.mxu0
      %v777 = vadd.f32 %v252, %v776
      %v778 = vpop.f32.mrf.mxu0
      %779 = vmatprep.mubr.f32.mxu0 0.0
      %780 = vmatmul.mubr.f32.gmra.mxu0 %v400
      %v781 = vpop.f32.mrf.mxu0
      %v782 = vadd.f32 %v252, %v781
      %v783 = vpop.f32.mrf.mxu0
      %784 = vmatprep.mubr.f32.mxu0 0.0
      %785 = vmatmul.mubr.f32.gmra.mxu0 %v403
      %v786 = vpop.f32.mrf.mxu0
      %v787 = vadd.f32 %v252, %v786
      %v788 = vpop.f32.mrf.mxu0
      %789 = vmatprep.mubr.f32.mxu0 0.0
      %790 = vmatmul.mubr.f32.gmra.mxu0 %v406
      %v791 = vpop.f32.mrf.mxu0
      %v792 = vadd.f32 %v252, %v791
      %v793 = vpop.f32.mrf.mxu0
      %794 = vmatprep.mubr.f32.mxu0 0.0
      %795 = vmatmul.mubr.f32.gmra.mxu0 %v409
      %v796 = vpop.f32.mrf.mxu0
      %v797 = vadd.f32 %v252, %v796
      %v798 = vpop.f32.mrf.mxu0
      %799 = vmatprep.mubr.f32.mxu0 0.0
      %800 = vmatmul.mubr.f32.gmra.mxu0 %v412
      %v801 = vpop.f32.mrf.mxu0
      %v802 = vadd.f32 %v252, %v801
      %v803 = vpop.f32.mrf.mxu0
      %804 = vmatprep.mubr.f32.mxu0 0.0
      %805 = vmatmul.mubr.f32.gmra.mxu0 %v415
      %v806 = vpop.f32.mrf.mxu0
      %v807 = vadd.f32 %v252, %v806
      %v808 = vpop.f32.mrf.mxu0
      %809 = vmatprep.mubr.f32.mxu0 0.0
      %810 = vmatmul.mubr.f32.gmra.mxu0 %v418
      %v811 = vpop.f32.mrf.mxu0
      %v812 = vadd.f32 %v252, %v811
      %v813 = vpop.f32.mrf.mxu0
      %814 = vmatprep.mubr.f32.mxu0 0.0
      %815 = vmatmul.mubr.f32.gmra.mxu0 %v421
      %v816 = vpop.f32.mrf.mxu0
      %v817 = vadd.f32 %v252, %v816
      %v818 = vpop.f32.mrf.mxu0
      %819 = vmatprep.mubr.f32.mxu0 0.0
      %820 = vmatmul.mubr.f32.gmra.mxu0 %v424
      %v821 = vpop.f32.mrf.mxu0
      %v822 = vadd.f32 %v252, %v821
      %v823 = vpop.f32.mrf.mxu0
      %824 = vmatprep.mubr.f32.mxu0 0.0
      %825 = vmatmul.mubr.f32.gmra.mxu0 %v427
      %v826 = vpop.f32.mrf.mxu0
      %v827 = vadd.f32 %v252, %v826
      %v828 = vpop.f32.mrf.mxu0
      %829 = vmatprep.mubr.f32.mxu0 0.0
      %830 = vmatmul.mubr.f32.gmra.mxu0 %v430
      %v831 = vpop.f32.mrf.mxu0
      %v832 = vadd.f32 %v252, %v831
      %v833 = vpop.f32.mrf.mxu0
      %834 = vmatprep.mubr.f32.mxu0 0.0
      %835 = vmatmul.mubr.f32.gmra.mxu0 %v433
      %v836 = vpop.f32.mrf.mxu0
      %v837 = vadd.f32 %v252, %v836
      %v838 = vpop.f32.mrf.mxu0
      %839 = vmatprep.mubr.f32.mxu0 0.0
      %840 = vmatmul.mubr.f32.gmra.mxu0 %v436
      %v841 = vpop.f32.mrf.mxu0
      %v842 = vadd.f32 %v252, %v841
      %v843 = vpop.f32.mrf.mxu0
      %844 = vmatprep.mubr.f32.mxu0 0.0
      %845 = vmatmul.mubr.f32.gmra.mxu0 %v439
      %v846 = vpop.f32.mrf.mxu0
      %v847 = vadd.f32 %v252, %v846
      %v848 = vpop.f32.mrf.mxu0
      %849 = vmatprep.mubr.f32.mxu0 0.0
      %850 = vmatmul.mubr.f32.gmra.mxu0 %v442
      %v851 = vpop.f32.mrf.mxu0
      %v852 = vadd.f32 %v252, %v851
      %v853 = vpop.f32.mrf.mxu0
      %854 = vmatprep.mubr.f32.mxu0 0.0
      %855 = vmatmul.mubr.f32.gmra.mxu0 %v445
      %v856 = vpop.f32.mrf.mxu0
      %v857 = vadd.f32 %v252, %v856
      %v858 = vpop.f32.mrf.mxu0
      %859 = vmatprep.mubr.f32.mxu0 0.0
      %860 = vmatmul.mubr.f32.gmra.mxu0 %v448
      %v861 = vpop.f32.mrf.mxu0
      %v862 = vadd.f32 %v252, %v861
      %v863 = vpop.f32.mrf.mxu0
      %864 = vmatprep.mubr.f32.mxu0 0.0
      %865 = vmatmul.mubr.f32.gmra.mxu0 %v451
      %v866 = vpop.f32.mrf.mxu0
      %v867 = vadd.f32 %v252, %v866
      %v868 = vpop.f32.mrf.mxu0
      %869 = vmatprep.mubr.f32.mxu0 0.0
      %870 = vmatmul.mubr.f32.gmra.mxu0 %v454
      %v871 = vpop.f32.mrf.mxu0
      %v872 = vadd.f32 %v252, %v871
      %v873 = vpop.f32.mrf.mxu0
      %874 = vmatprep.mubr.f32.mxu0 0.0
      %875 = vmatmul.mubr.f32.gmra.mxu0 %v457
      %v876 = vpop.f32.mrf.mxu0
      %v877 = vadd.f32 %v252, %v876
      %v878 = vpop.f32.mrf.mxu0
      %879 = vmatprep.mubr.f32.mxu0 0.0
      %880 = vmatmul.mubr.f32.gmra.mxu0 %v460
      %v881 = vpop.f32.mrf.mxu0
      %v882 = vadd.f32 %v252, %v881
      %v883 = vpop.f32.mrf.mxu0
      %884 = vmatprep.mubr.f32.mxu0 0.0
      %885 = vmatmul.mubr.f32.gmra.mxu0 %v463
      %v886 = vpop.f32.mrf.mxu0
      %v887 = vadd.f32 %v252, %v886
      %v888 = vpop.f32.mrf.mxu0
      %889 = vmatprep.mubr.f32.mxu0 0.0
      %890 = vmatmul.mubr.f32.gmra.mxu0 %v466
      %v891 = vpop.f32.mrf.mxu0
      %v892 = vadd.f32 %v252, %v891
      %v893 = vpop.f32.mrf.mxu0
      %894 = vmatprep.mubr.f32.mxu0 0.0
      %895 = vmatmul.mubr.f32.gmra.mxu0 %v469
      %v896 = vpop.f32.mrf.mxu0
      %v897 = vadd.f32 %v252, %v896
      %v898 = vpop.f32.mrf.mxu0
      %899 = vdwg.mxu0
      %v900 = vmax.f32 %v542, %v632
      %v901 = vmax.f32 %v547, %v637
      %v902 = vmax.f32 %v552, %v642
      %v903 = vmax.f32 %v557, %v647
      %v904 = vmax.f32 %v562, %v652
      %v905 = vmax.f32 %v567, %v657
      %v906 = vmax.f32 %v572, %v662
      %v907 = vmax.f32 %v577, %v667
      %v908 = vmax.f32 %v582, %v672
      %v909 = vmax.f32 %v587, %v677
      %v910 = vmax.f32 %v592, %v682
      %v911 = vmax.f32 %v597, %v687
      %v912 = vmax.f32 %v602, %v692
      %v913 = vmax.f32 %v607, %v697
      %v914 = vmax.f32 %v612, %v702
      %v915 = vmax.f32 %v617, %v707
      %v916 = vmax.f32 %v622, %v712
      %v917 = vmax.f32 %v627, %v717
      %v918 = vmax.f32 %v722, %v812
      %v919 = vmax.f32 %v727, %v817
      %v920 = vmax.f32 %v732, %v822
      %v921 = vmax.f32 %v737, %v827
      %v922 = vmax.f32 %v742, %v832
      %v923 = vmax.f32 %v747, %v837
      %v924 = vmax.f32 %v752, %v842
      %v925 = vmax.f32 %v757, %v847
      %v926 = vmax.f32 %v762, %v852
      %v927 = vmax.f32 %v767, %v857
      %v928 = vmax.f32 %v772, %v862
      %v929 = vmax.f32 %v777, %v867
      %v930 = vmax.f32 %v782, %v872
      %v931 = vmax.f32 %v787, %v877
      %v932 = vmax.f32 %v792, %v882
      %v933 = vmax.f32 %v797, %v887
      %v934 = vmax.f32 %v802, %v892
      %v935 = vmax.f32 %v807, %v897
      %v936 = vmax.f32 %v900, %v918
      %v937 = vmax.f32 %v901, %v919
      %v938 = vmax.f32 %v902, %v920
      %v939 = vmax.f32 %v903, %v921
      %v940 = vmax.f32 %v904, %v922
      %v941 = vmax.f32 %v905, %v923
      %v942 = vmax.f32 %v906, %v924
      %v943 = vmax.f32 %v907, %v925
      %v944 = vmax.f32 %v908, %v926
      %v945 = vmax.f32 %v909, %v927
      %v946 = vmax.f32 %v910, %v928
      %v947 = vmax.f32 %v911, %v929
      %v948 = vmax.f32 %v912, %v930
      %v949 = vmax.f32 %v913, %v931
      %v950 = vmax.f32 %v914, %v932
      %v951 = vmax.f32 %v915, %v933
      %v952 = vmax.f32 %v916, %v934
      %v953 = vmax.f32 %v917, %v935
      %v954 = vmax.f32 %v936, 0.0
      %v955 = vmax.f32 %v937, 0.0
      %v956 = vmax.f32 %v938, 0.0
      %v957 = vmax.f32 %v939, 0.0
      %v958 = vmax.f32 %v940, 0.0
      %v959 = vmax.f32 %v941, 0.0
      %v960 = vmax.f32 %v942, 0.0
      %v961 = vmax.f32 %v943, 0.0
      %v962 = vmax.f32 %v944, 0.0
      %v963 = vmax.f32 %v945, 0.0
      %v964 = vmax.f32 %v946, 0.0
      %v965 = vmax.f32 %v947, 0.0
      %v966 = vmax.f32 %v948, 0.0
      %v967 = vmax.f32 %v949, 0.0
      %v968 = vmax.f32 %v950, 0.0
      %v969 = vmax.f32 %v951, 0.0
      %v970 = vmax.f32 %v952, 0.0
      %v971 = vmax.f32 %v953, 0.0
      %vm972 = vcmask 80896
      %973 = vst.msk [vmem:[%s170] sm:$0xff] %vm972, %v954
      %974 = vst.msk [vmem:[%s170 + $0x8] sm:$0xff] %vm972, %v955
      %975 = vst.msk [vmem:[%s170 + $0x10] sm:$0xff] %vm972, %v956
      %976 = vst.msk [vmem:[%s170 + $0x18] sm:$0xff] %vm972, %v957
      %977 = vst.msk [vmem:[%s170 + $0x20] sm:$0xff] %vm972, %v958
      %978 = vst.msk [vmem:[%s170 + $0x28] sm:$0xff] %vm972, %v959
      %979 = vst.msk [vmem:[%s170 + $0x30] sm:$0xff] %vm972, %v960
      %980 = vst.msk [vmem:[%s170 + $0x38] sm:$0xff] %vm972, %v961
      %981 = vst.msk [vmem:[%s170 + $0x40] sm:$0xff] %vm972, %v962
      %982 = vst.msk [vmem:[%s170 + $0x48] sm:$0xff] %vm972, %v963
      %983 = vst.msk [vmem:[%s170 + $0x50] sm:$0xff] %vm972, %v964
      %984 = vst.msk [vmem:[%s170 + $0x58] sm:$0xff] %vm972, %v965
      %985 = vst.msk [vmem:[%s170 + $0x60] sm:$0xff] %vm972, %v966
      %986 = vst.msk [vmem:[%s170 + $0x68] sm:$0xff] %vm972, %v967
      %987 = vst.msk [vmem:[%s170 + $0x70] sm:$0xff] %vm972, %v968
      %988 = vst.msk [vmem:[%s170 + $0x78] sm:$0xff] %vm972, %v969
      %989 = vst.msk [vmem:[%s170 + $0x80] sm:$0xff] %vm972, %v970
      %990 = vst.msk [vmem:[%s170 + $0x88] sm:$0xff] %vm972, %v971
      %p991 = scmp.lt.s32.totalorder %s14, 1
      %s992 = scalar_select %p991, %s14, 1
      %s993 = smul.addr %s992, 18
      %s994 = smul.addr %s993, 8
      %s995 = scalar_lea.vmem %s3, %s994
      // Predicated region
      $region33: #{net_forward.3} parent=31 // pred_check
        %p996 = pneg %p100
      $region34: #{net_forward.3} parent=31 // pred_check_branch
        %998 = sbr.rel (%p996) target = $region36
      $region35: #{net_forward.3} parent=31 // pred_region
        _
      $region36: #{net_forward.3} parent=31 // pred_fallthru
        _
    $region32: #{net_forward.3} parent=5 // pred_fallthru
      _
    %p999 = scmp.le.s32.totalorder 2, %s9
    // Predicated region
    $region37: #{net_forward.3} parent=5 // pred_check
      %p1000 = pneg %p999
    $region38: #{net_forward.3} parent=5 // pred_check_branch
      %1002 = sbr.rel (%p1000) target = $region40
    $region39: #{net_forward.3} parent=5 // pred_region
      %s1003 = ssub.s32 %s9, 2
      // Predicated region
      $region41: #{net_forward.3} parent=39 // pred_check
        %p1004 = pneg %p106
      $region42: #{net_forward.3} parent=39 // pred_check_branch
        %1006 = sbr.rel (%p1004) target = $region44
      $region43: #{net_forward.3} parent=39 // pred_region
        %p1007 = scmp.lt.s32.totalorder %s15, 1
        %s1008 = scalar_select %p1007, %s15, 1
        %s1009 = smul.addr %s1008, 18
        %s1010 = smul.addr %s1009, 8
        %s1011 = scalar_lea.vmem %s3, %s1010
      $region44: #{net_forward.3} parent=39 // pred_fallthru
        _
    $region40: #{net_forward.3} parent=5 // pred_fallthru
      _
  $region6: #{net_forward.3} parent=0 // loop_footer
    %s13 = sadd.s32 1, %s9
  $region7: #{net_forward.3} parent=0 // loop_footer_branch
    %8 = sbr.rel target = $region3
  $region8: #{net_forward.3} parent=0 // loop_exit
    _

// kernel: net_forward.4
$region0: #{net_forward.4}
  #allocation0 [shape = 'u32[]', space=smem, size = 0x4, offset = 0x4, fixed_abs, tag = 'smem constant byte address 0x4 - core index']
  #allocation1 [shape = 'u32[144,128]{1,0:T(1,128)}', space=vmem, size = 0x12000, scoped, tag = 'internal scratch']
  %s0 = inlined_call_operand.vmem [shape: f32[2,64,250], index: 0, kind: input, shape index: {}]
  %s1 = inlined_call_operand.vmem [shape: f32[250,20], index: 1, kind: input, shape index: {}]
  %s2 = inlined_call_operand.vmem [shape: f32[1,20], index: 2, kind: input, shape index: {}]
  %s3 = inlined_call_operand.vmem [shape: f32[2,16,20], index: 3, kind: output, shape index: {}]
  %s4 = sld [smem:[#allocation0]]
  $region45: #{net_forward.4} parent=0
    _
  %s6 = ssub.s32 1, %s4
  %s7 = scalar_select 0, %s6, %s4
  loop: start=0, step=1, limit=4
  $region2: #{net_forward.4} parent=0 // loop_pre_header
    _
  $region3: #{net_forward.4} parent=0 // loop_header
    %s9 = sphi 0, %s13
    %p10 = scmp.ge.s32.totalorder %s9, 4
    %s19 = sphi 0, %s21
    %s22 = sphi 0, %s19
    %s23 = sphi 0, %s22
    %s39 = sphi 0, %s23
    %s43 = sphi 0, %s43
    %s45 = sphi 0, %s43
    %s46 = sphi 0, %s45
    %s60 = sphi 0, %s46
    %s64 = sphi 0, %s64
    %s66 = sphi 0, %s64
    %s67 = sphi 0, %s66
    %s81 = sphi 0, %s67
    %s87 = sphi 0, %s89
    %s90 = sphi 0, %s87
    %s91 = sphi 0, %s90
    %s107 = sphi 0, %s91
  $region4: #{net_forward.4} parent=0 // loop_header_branch
    %12 = sbr.rel (%p10) target = $region8
  $region5: #{net_forward.4} parent=0 // loop_body
    %s14 = ssub.s32 %s9, 1
    %s15 = ssub.s32 %s9, 2
    %s16 = sadd.s32 %s9, 1
    %s17 = ssub.s32 %s9, %s16
    %p18 = scmp.eq.s32.totalorder %s17, 0
    %s20 = sadd.s32 %s19, 1
    %s21 = scalar_select %p18, %s19, %s20
    %p24 = pneg %p18
    %p25 = scmp.eq.s32.totalorder %s9, 1
    %p26 = por %p24, %p25
    %p27 = scmp.ne.s32.totalorder %s19, %s22
    %p28 = scmp.eq.s32.totalorder %s9, 0
    %p29 = por %p27, %p28
    %p30 = scmp.ne.s32.totalorder %s19, %s22
    %p31 = scmp.eq.s32.totalorder %s14, 1
    %p32 = por %p30, %p31
    %p33 = scmp.ne.s32.totalorder %s22, %s23
    %p34 = scmp.eq.s32.totalorder %s14, 0
    %p35 = por %p33, %p34
    %p36 = scmp.ne.s32.totalorder %s22, %s23
    %p37 = scmp.eq.s32.totalorder %s15, 1
    %p38 = por %p36, %p37
    %p40 = scmp.ne.s32.totalorder %s23, %s39
    %p41 = scmp.eq.s32.totalorder %s15, 0
    %p42 = por %p40, %p41
    %s44 = sadd.s32 %s43, 1
    %p47 = scmp.eq.s32.totalorder %s9, 1
    %p48 = scmp.ne.s32.totalorder %s43, %s45
    %p49 = scmp.eq.s32.totalorder %s9, 0
    %p50 = por %p48, %p49
    %p51 = scmp.ne.s32.totalorder %s43, %s45
    %p52 = scmp.eq.s32.totalorder %s14, 1
    %p53 = por %p51, %p52
    %p54 = scmp.ne.s32.totalorder %s45, %s46
    %p55 = scmp.eq.s32.totalorder %s14, 0
    %p56 = por %p54, %p55
    %p57 = scmp.ne.s32.totalorder %s45, %s46
    %p58 = scmp.eq.s32.totalorder %s15, 1
    %p59 = por %p57, %p58
    %p61 = scmp.ne.s32.totalorder %s46, %s60
    %p62 = scmp.eq.s32.totalorder %s15, 0
    %p63 = por %p61, %p62
    %s65 = sadd.s32 %s64, 1
    %p68 = scmp.eq.s32.totalorder %s9, 1
    %p69 = scmp.ne.s32.totalorder %s64, %s66
    %p70 = scmp.eq.s32.totalorder %s9, 0
    %p71 = por %p69, %p70
    %p72 = scmp.ne.s32.totalorder %s64, %s66
    %p73 = scmp.eq.s32.totalorder %s14, 1
    %p74 = por %p72, %p73
    %p75 = scmp.ne.s32.totalorder %s66, %s67
    %p76 = scmp.eq.s32.totalorder %s14, 0
    %p77 = por %p75, %p76
    %p78 = scmp.ne.s32.totalorder %s66, %s67
    %p79 = scmp.eq.s32.totalorder %s15, 1
    %p80 = por %p78, %p79
    %p82 = scmp.ne.s32.totalorder %s67, %s81
    %p83 = scmp.eq.s32.totalorder %s15, 0
    %p84 = por %p82, %p83
    %s85 = ssub.s32 %s9, %s16
    %p86 = scmp.eq.s32.totalorder %s85, 0
    %s88 = sadd.s32 %s87, 1
    %s89 = scalar_select %p86, %s87, %s88
    %p92 = pneg %p86
    %p93 = scmp.eq.s32.totalorder %s9, 1
    %p94 = por %p92, %p93
    %p95 = scmp.ne.s32.totalorder %s87, %s90
    %p96 = scmp.eq.s32.totalorder %s9, 0
    %p97 = por %p95, %p96
    %p98 = scmp.ne.s32.totalorder %s87, %s90
    %p99 = scmp.eq.s32.totalorder %s14, 1
    %p100 = por %p98, %p99
    %p101 = scmp.ne.s32.totalorder %s90, %s91
    %p102 = scmp.eq.s32.totalorder %s14, 0
    %p103 = por %p101, %p102
    %p104 = scmp.ne.s32.totalorder %s90, %s91
    %p105 = scmp.eq.s32.totalorder %s15, 1
    %p106 = por %p104, %p105
    %p108 = scmp.ne.s32.totalorder %s91, %s107
    %p109 = scmp.eq.s32.totalorder %s15, 0
    %p110 = por %p108, %p109
    %p111 = scmp.le.s32.totalorder 1, %s9
    %p112 = scmp.lt.s32.totalorder %s9, 3
    %p113 = pnand %p111, %p112
    %p114 = pneg %p113
    // Predicated region
    $region9: #{net_forward.4} parent=5 // pred_check
      _
    $region10: #{net_forward.4} parent=5 // pred_check_branch
      %116 = sbr.rel (%p113) target = $region12
    $region11: #{net_forward.4} parent=5 // pred_region
      %s117 = ssub.s32 %s9, 1
      // Predicated region
      $region13: #{net_forward.4} parent=11 // pred_check
        %p118 = pneg %p56
      $region14: #{net_forward.4} parent=11 // pred_check_branch
        %120 = sbr.rel (%p118) target = $region16
      $region15: #{net_forward.4} parent=11 // pred_region
        _
      $region16: #{net_forward.4} parent=11 // pred_fallthru
        _
      // Predicated region
      $region17: #{net_forward.4} parent=11 // pred_check
        %p121 = pneg %p77
      $region18: #{net_forward.4} parent=11 // pred_check_branch
        %123 = sbr.rel (%p121) target = $region20
      $region19: #{net_forward.4} parent=11 // pred_region
        _
      $region20: #{net_forward.4} parent=11 // pred_fallthru
        _
    $region12: #{net_forward.4} parent=5 // pred_fallthru
      _
    %p124 = scmp.lt.s32.totalorder %s9, 2
    // Predicated region
    $region21: #{net_forward.4} parent=5 // pred_check
      %p125 = pneg %p124
    $region22: #{net_forward.4} parent=5 // pred_check_branch
      %127 = sbr.rel (%p125) target = $region24
    $region23: #{net_forward.4} parent=5 // pred_region
      // Predicated region
      $region25: #{net_forward.4} parent=23 // pred_check
        %p128 = pneg %p29
      $region26: #{net_forward.4} parent=23 // pred_check_branch
        %130 = sbr.rel (%p128) target = $region28
      $region27: #{net_forward.4} parent=23 // pred_region
        %p131 = scmp.lt.s32.totalorder %s9, 1
        %s132 = scalar_select %p131, %s9, 1
        %s133 = smul.addr %s132, 16
        %s134 = smul.addr %s133, 8
        %s135 = scalar_lea.vmem %s0, %s134
      $region28: #{net_forward.4} parent=23 // pred_fallthru
        _
    $region24: #{net_forward.4} parent=5 // pred_fallthru
      _
    %p136 = scmp.le.s32.totalorder 1, %s9
    %p137 = scmp.lt.s32.totalorder %s9, 3
    %p138 = pnand %p136, %p137
    %p139 = pneg %p138
    // Predicated region
    $region29: #{net_forward.4} parent=5 // pred_check
      _
    $region30: #{net_forward.4} parent=5 // pred_check_branch
      %141 = sbr.rel (%p138) target = $region32
    $region31: #{net_forward.4} parent=5 // pred_region
      %s142 = ssub.s32 %s9, 1
      %p143 = scmp.lt.s32.totalorder %s14, 1
      %s144 = scalar_select %p143, %s14, 1
      %s145 = smul.addr %s144, 16
      %s146 = smul.addr %s145, 8
      %s147 = scalar_lea.vmem %s0, %s146
      %p148 = pneg %p35
      %p149 = pneg %p32
      %p150 = pneg %p56
      %p151 = pneg %p53
      %p152 = pneg %p77
      %p153 = pneg %p74
      %p154 = pneg %p103
      %p155 = pneg %p100
      %p156 = scmp.lt.s32.totalorder %s14, 1
      %s157 = scalar_select %p156, %s14, 1
      %s158 = smul.addr %s157, 2
      %s159 = smul.addr %s158, 8
      %s160 = scalar_lea.vmem %s3, %s159
      %p161 = scmp.lt.s32.totalorder %s14, 1
      %s162 = scalar_select %p161, %s14, 1
      %s163 = smul.addr %s162, 16
      %s164 = smul.addr %s163, 8
      %s165 = scalar_lea.vmem %s0, %s164
      %p166 = scmp.lt.s32.totalorder %s14, 1
      %s167 = scalar_select %p166, %s14, 1
      %s168 = smul.addr %s167, 2
      %s169 = smul.addr %s168, 8
      %s170 = scalar_lea.vmem %s3, %s169
      %v171 = vld [vmem:[%s165] sm:$0xff]
      %v172 = vld [vmem:[%s165 + $0x8] sm:$0xff]
      %v173 = vld [vmem:[%s165 + $0x10] sm:$0xff]
      %v174 = vld [vmem:[%s165 + $0x18] sm:$0xff]
      %v175 = vld [vmem:[%s165 + $0x20] sm:$0xff]
      %v176 = vld [vmem:[%s165 + $0x28] sm:$0xff]
      %v177 = vld [vmem:[%s165 + $0x30] sm:$0xff]
      %v178 = vld [vmem:[%s165 + $0x38] sm:$0xff]
      %v179 = vld [vmem:[%s165 + $0x40] sm:$0xff]
      %v180 = vld [vmem:[%s165 + $0x48] sm:$0xff]
      %v181 = vld [vmem:[%s165 + $0x50] sm:$0xff]
      %v182 = vld [vmem:[%s165 + $0x58] sm:$0xff]
      %v183 = vld [vmem:[%s165 + $0x60] sm:$0xff]
      %v184 = vld [vmem:[%s165 + $0x68] sm:$0xff]
      %v185 = vld [vmem:[%s165 + $0x70] sm:$0xff]
      %v186 = vld [vmem:[%s165 + $0x78] sm:$0xff]
      %v187 = vld [vmem:[%s1] sm:$0xff]
      %v188 = vld [vmem:[%s1 + $0x8] sm:$0xff]
      %v189 = vld [vmem:[%s1 + $0x10] sm:$0xff]
      %v190 = vld [vmem:[%s1 + $0x18] sm:$0xff]
      %v191 = vld [vmem:[%s1 + $0x20] sm:$0xff]
      %v192 = vld [vmem:[%s1 + $0x28] sm:$0xff]
      %v193 = vld [vmem:[%s1 + $0x30] sm:$0xff]
      %v194 = vld [vmem:[%s1 + $0x38] sm:$0xff]
      %v195 = vld [vmem:[%s1 + $0x40] sm:$0xff]
      %v196 = vld [vmem:[%s1 + $0x48] sm:$0xff]
      %v197 = vld [vmem:[%s1 + $0x50] sm:$0xff]
      %v198 = vld [vmem:[%s1 + $0x58] sm:$0xff]
      %v199 = vld [vmem:[%s1 + $0x60] sm:$0xff]
      %v200 = vld [vmem:[%s1 + $0x68] sm:$0xff]
      %v201 = vld [vmem:[%s1 + $0x70] sm:$0xff]
      %v202 = vld [vmem:[%s1 + $0x78] sm:$0xff]
      %v203 = vld [vmem:[%s1 + $0x80] sm:$0xff]
      %v204 = vld [vmem:[%s1 + $0x88] sm:$0xff]
      %v205 = vld [vmem:[%s1 + $0x90] sm:$0xff]
      %v206 = vld [vmem:[%s1 + $0x98] sm:$0xff]
      %v207 = vld [vmem:[%s1 + $0xa0] sm:$0xff]
      %v208 = vld [vmem:[%s1 + $0xa8] sm:$0xff]
      %v209 = vld [vmem:[%s1 + $0xb0] sm:$0xff]
      %v210 = vld [vmem:[%s1 + $0xb8] sm:$0xff]
      %v211 = vld [vmem:[%s1 + $0xc0] sm:$0xff]
      %v212 = vld [vmem:[%s1 + $0xc8] sm:$0xff]
      %v213 = vld [vmem:[%s1 + $0xd0] sm:$0xff]
      %v214 = vld [vmem:[%s1 + $0xd8] sm:$0xff]
      %v215 = vld [vmem:[%s1 + $0xe0] sm:$0xff]
      %v216 = vld [vmem:[%s1 + $0xe8] sm:$0xff]
      %v217 = vld [vmem:[%s1 + $0xf0] sm:$0xff]
      %v218 = vld [vmem:[%s1 + $0xf8] sm:$0x3]
      %v219 = vld [vmem:[%s2] sm:$0x1]
      %v221 = vlaneseq
      %v222 = vshrl.u32 %v221, 7
      %v223 = vsub.s32 0, %v222
      %v224 = vrot.slane %v219, %v223
      %vm226 = vcmask 998400
      %v228 = vsel %vm226, %v172, 0
      %v231 = vsel %vm226, %v174, 0
      %v234 = vsel %vm226, %v176, 0
      %v237 = vsel %vm226, %v178, 0
      %v240 = vsel %vm226, %v180, 0
      %v243 = vsel %vm226, %v182, 0
      %v246 = vsel %vm226, %v184, 0
      %v249 = vsel %vm226, %v186, 0
      %vm251 = vcmask 1041408
      %v253 = vsel %vm251, %v218, 0
      %255 = vmatprep.subr.mxu0 0.0
      %256 = vmatpush1.msra.mxu0 %v202
      %257 = vmatprep.subr.mxu0 0.0
      %258 = vmatpush1.msra.mxu0 %v201
      %259 = vmatprep.subr.mxu0 0.0
      %260 = vmatpush1.msra.mxu0 %v200
      %261 = vmatprep.subr.mxu0 0.0
      %262 = vmatpush1.msra.mxu0 %v199
      %263 = vmatprep.subr.mxu0 0.0
      %264 = vmatpush1.msra.mxu0 %v198
      %265 = vmatprep.subr.mxu0 0.0
      %266 = vmatpush1.msra.mxu0 %v197
      %267 = vmatprep.subr.mxu0 0.0
      %268 = vmatpush1.msra.mxu0 %v196
      %269 = vmatprep.subr.mxu0 0.0
      %270 = vmatpush1.msra.mxu0 %v195
      %271 = vmatprep.subr.mxu0 0.0
      %272 = vmatpush1.msra.mxu0 %v194
      %273 = vmatprep.subr.mxu0 0.0
      %274 = vmatpush1.msra.mxu0 %v193
      %275 = vmatprep.subr.mxu0 0.0
      %276 = vmatpush1.msra.mxu0 %v192
      %277 = vmatprep.subr.mxu0 0.0
      %278 = vmatpush1.msra.mxu0 %v191
      %279 = vmatprep.subr.mxu0 0.0
      %280 = vmatpush1.msra.mxu0 %v190
      %281 = vmatprep.subr.mxu0 0.0
      %282 = vmatpush1.msra.mxu0 %v189
      %283 = vmatprep.subr.mxu0 0.0
      %284 = vmatpush1.msra.mxu0 %v188
      %285 = vmatprep.subr.mxu0 0.0
      %286 = vmatpush1.msra.mxu0 %v187
      %287 = vmatprep.subr.mxu0 0.0
      %288 = vmatpush2.msra.mxu0 %v253
      %289 = vmatprep.subr.mxu0 0.0
      %290 = vmatpush2.msra.mxu0 %v217
      %291 = vmatprep.subr.mxu0 0.0
      %292 = vmatpush2.msra.mxu0 %v216
      %293 = vmatprep.subr.mxu0 0.0
      %294 = vmatpush2.msra.mxu0 %v215
      %295 = vmatprep.subr.mxu0 0.0
      %296 = vmatpush2.msra.mxu0 %v214
      %297 = vmatprep.subr.mxu0 0.0
      %298 = vmatpush2.msra.mxu0 %v213
      %299 = vmatprep.subr.mxu0 0.0
      %300 = vmatpush2.msra.mxu0 %v212
      %301 = vmatprep.subr.mxu0 0.0
      %302 = vmatpush2.msra.mxu0 %v211
      %303 = vmatprep.subr.mxu0 0.0
      %304 = vmatpush2.msra.mxu0 %v210
      %305 = vmatprep.subr.mxu0 0.0
      %306 = vmatpush2.msra.mxu0 %v209
      %307 = vmatprep.subr.mxu0 0.0
      %308 = vmatpush2.msra.mxu0 %v208
      %309 = vmatprep.subr.mxu0 0.0
      %310 = vmatpush2.msra.mxu0 %v207
      %311 = vmatprep.subr.mxu0 0.0
      %312 = vmatpush2.msra.mxu0 %v206
      %313 = vmatprep.subr.mxu0 0.0
      %314 = vmatpush2.msra.mxu0 %v205
      %315 = vmatprep.subr.mxu0 0.0
      %316 = vmatpush2.msra.mxu0 %v204
      %317 = vmatprep.subr.mxu0 0.0
      %318 = vmatpush2.msra.mxu0 %v203
      %319 = vmatprep.mubr.f32.mxu0 %v228
      %320 = vmatmul.mubr.f32.gmra.mxu0 %v171
      %v321 = vpop.f32.mrf.mxu0
      %v322 = vadd.f32 %v224, %v321
      %v323 = vpop.f32.mrf.mxu0
      %324 = vmatprep.mubr.f32.mxu0 %v231
      %325 = vmatmul.mubr.f32.gmra.mxu0 %v173
      %v326 = vpop.f32.mrf.mxu0
      %v327 = vadd.f32 %v224, %v326
      %v328 = vpop.f32.mrf.mxu0
      %329 = vmatprep.mubr.f32.mxu0 %v234
      %330 = vmatmul.mubr.f32.gmra.mxu0 %v175
      %v331 = vpop.f32.mrf.mxu0
      %v332 = vadd.f32 %v224, %v331
      %v333 = vpop.f32.mrf.mxu0
      %334 = vmatprep.mubr.f32.mxu0 %v237
      %335 = vmatmul.mubr.f32.gmra.mxu0 %v177
      %v336 = vpop.f32.mrf.mxu0
      %v337 = vadd.f32 %v224, %v336
      %v338 = vpop.f32.mrf.mxu0
      %339 = vmatprep.mubr.f32.mxu0 %v240
      %340 = vmatmul.mubr.f32.gmra.mxu0 %v179
      %v341 = vpop.f32.mrf.mxu0
      %v342 = vadd.f32 %v224, %v341
      %v343 = vpop.f32.mrf.mxu0
      %344 = vmatprep.mubr.f32.mxu0 %v243
      %345 = vmatmul.mubr.f32.gmra.mxu0 %v181
      %v346 = vpop.f32.mrf.mxu0
      %v347 = vadd.f32 %v224, %v346
      %v348 = vpop.f32.mrf.mxu0
      %349 = vmatprep.mubr.f32.mxu0 %v246
      %350 = vmatmul.mubr.f32.gmra.mxu0 %v183
      %v351 = vpop.f32.mrf.mxu0
      %v352 = vadd.f32 %v224, %v351
      %v353 = vpop.f32.mrf.mxu0
      %354 = vmatprep.mubr.f32.mxu0 %v249
      %355 = vmatmul.mubr.f32.gmra.mxu0 %v185
      %v356 = vpop.f32.mrf.mxu0
      %v357 = vadd.f32 %v224, %v356
      %v358 = vpop.f32.mrf.mxu0
      %359 = vdwg.mxu0
      %v360 = vmax.f32 %v322, %v332
      %v361 = vmax.f32 %v327, %v337
      %v362 = vmax.f32 %v342, %v352
      %v363 = vmax.f32 %v347, %v357
      %v364 = vmax.f32 %v360, %v362
      %v365 = vmax.f32 %v361, %v363
      %v366 = vmax.f32 %v364, 0.0
      %v367 = vmax.f32 %v365, 0.0
      %vm368 = vcmask 162816
      %369 = vst.msk [vmem:[%s170] sm:$0xff] %vm368, %v366
      %370 = vst.msk [vmem:[%s170 + $0x8] sm:$0xff] %vm368, %v367
      %p371 = scmp.lt.s32.totalorder %s14, 1
      %s372 = scalar_select %p371, %s14, 1
      %s373 = smul.addr %s372, 2
      %s374 = smul.addr %s373, 8
      %s375 = scalar_lea.vmem %s3, %s374
      // Predicated region
      $region33: #{net_forward.4} parent=31 // pred_check
        %p376 = pneg %p100
      $region34: #{net_forward.4} parent=31 // pred_check_branch
        %378 = sbr.rel (%p376) target = $region36
      $region35: #{net_forward.4} parent=31 // pred_region
        _
      $region36: #{net_forward.4} parent=31 // pred_fallthru
        _
    $region32: #{net_forward.4} parent=5 // pred_fallthru
      _
    %p379 = scmp.le.s32.totalorder 2, %s9
    // Predicated region
    $region37: #{net_forward.4} parent=5 // pred_check
      %p380 = pneg %p379
    $region38: #{net_forward.4} parent=5 // pred_check_branch
      %382 = sbr.rel (%p380) target = $region40
    $region39: #{net_forward.4} parent=5 // pred_region
      %s383 = ssub.s32 %s9, 2
      // Predicated region
      $region41: #{net_forward.4} parent=39 // pred_check
        %p384 = pneg %p106
      $region42: #{net_forward.4} parent=39 // pred_check_branch
        %386 = sbr.rel (%p384) target = $region44
      $region43: #{net_forward.4} parent=39 // pred_region
        %p387 = scmp.lt.s32.totalorder %s15, 1
        %s388 = scalar_select %p387, %s15, 1
        %s389 = smul.addr %s388, 2
        %s390 = smul.addr %s389, 8
        %s391 = scalar_lea.vmem %s3, %s390
      $region44: #{net_forward.4} parent=39 // pred_fallthru
        _
    $region40: #{net_forward.4} parent=5 // pred_fallthru
      _
  $region6: #{net_forward.4} parent=0 // loop_footer
    %s13 = sadd.s32 1, %s9
  $region7: #{net_forward.4} parent=0 // loop_footer_branch
    %8 = sbr.rel target = $region3
  $region8: #{net_forward.4} parent=0 // loop_exit
    _

// kernel: net_forward.5
$region0: #{net_forward.5}
  #allocation0 [shape = 'u32[]', space=smem, size = 0x4, offset = 0x4, fixed_abs, tag = 'smem constant byte address 0x4 - core index']
  #allocation1 [shape = 'u32[144,128]{1,0:T(1,128)}', space=vmem, size = 0x12000, scoped, tag = 'internal scratch']
  %s0 = inlined_call_operand.vmem [shape: f32[2,320], index: 0, kind: input, shape index: {}]
  %s1 = inlined_call_operand.vmem [shape: f32[320,50], index: 1, kind: input, shape index: {}]
  %s2 = inlined_call_operand.vmem [shape: f32[1,50], index: 2, kind: input, shape index: {}]
  %s3 = inlined_call_operand.vmem [shape: f32[50,10], index: 3, kind: input, shape index: {}]
  %s4 = inlined_call_operand.vmem [shape: f32[1,10], index: 4, kind: input, shape index: {}]
  %s5 = inlined_call_operand.hbm [shape: f32[2,10], index: 5, kind: output, shape index: {}]
  %s6 = sld [smem:[#allocation0]]
  $region30: #{net_forward.5} parent=0
    _
  %s8 = ssub.s32 1, %s6
  %s9 = scalar_select 0, %s8, %s6
  $region1: #{net_forward.5} parent=0
    #allocation2 [shape = 'u8[1024]{0}', space=vmem, size = 0x400, scoped, tag = 'output window, operand 0, single buffered']
    #allocation3 [shape = 's32[1]{0}', space=sflag, size = 0x4, scoped, tag = 'scoped memory for net_forward.5']
    %10 = vsyncpa [#allocation3], 0
    // Predicated region
    $region2: #{net_forward.5} parent=1 // pred_check
      _
    $region3: #{net_forward.5} parent=1 // pred_check_branch
      %12 = sbr.rel (0) target = $region5
    $region4: #{net_forward.5} parent=1 // pred_region
      _
    $region5: #{net_forward.5} parent=1 // pred_fallthru
      _
    // Predicated region
    $region6: #{net_forward.5} parent=1 // pred_check
      _
    $region7: #{net_forward.5} parent=1 // pred_check_branch
      %14 = sbr.rel (0) target = $region9
    $region8: #{net_forward.5} parent=1 // pred_region
      _
    $region9: #{net_forward.5} parent=1 // pred_fallthru
      _
    // Predicated region
    $region10: #{net_forward.5} parent=1 // pred_check
      _
    $region11: #{net_forward.5} parent=1 // pred_check_branch
      %16 = sbr.rel (0) target = $region13
    $region12: #{net_forward.5} parent=1 // pred_region
      _
    $region13: #{net_forward.5} parent=1 // pred_fallthru
      _
    // Predicated region
    $region14: #{net_forward.5} parent=1 // pred_check
      _
    $region15: #{net_forward.5} parent=1 // pred_check_branch
      %18 = sbr.rel (0) target = $region17
    $region16: #{net_forward.5} parent=1 // pred_region
      _
    $region17: #{net_forward.5} parent=1 // pred_fallthru
      _
    // Predicated region
    $region18: #{net_forward.5} parent=1 // pred_check
      _
    $region19: #{net_forward.5} parent=1 // pred_check_branch
      %20 = sbr.rel (0) target = $region21
    $region20: #{net_forward.5} parent=1 // pred_region
      _
    $region21: #{net_forward.5} parent=1 // pred_fallthru
      _
    %v21 = vld [vmem:[%s0] sm:$0x3f]
    %v22 = vld [vmem:[%s1] sm:$0xff]
    %v23 = vld [vmem:[%s1 + $0x8] sm:$0xff]
    %v24 = vld [vmem:[%s1 + $0x10] sm:$0xff]
    %v25 = vld [vmem:[%s1 + $0x18] sm:$0xff]
    %v26 = vld [vmem:[%s1 + $0x20] sm:$0xff]
    %v27 = vld [vmem:[%s1 + $0x28] sm:$0xff]
    %v28 = vld [vmem:[%s1 + $0x30] sm:$0xff]
    %v29 = vld [vmem:[%s1 + $0x38] sm:$0xff]
    %v30 = vld [vmem:[%s1 + $0x40] sm:$0xff]
    %v31 = vld [vmem:[%s1 + $0x48] sm:$0xff]
    %v32 = vld [vmem:[%s1 + $0x50] sm:$0xff]
    %v33 = vld [vmem:[%s1 + $0x58] sm:$0xff]
    %v34 = vld [vmem:[%s1 + $0x60] sm:$0xff]
    %v35 = vld [vmem:[%s1 + $0x68] sm:$0xff]
    %v36 = vld [vmem:[%s1 + $0x70] sm:$0xff]
    %v37 = vld [vmem:[%s1 + $0x78] sm:$0xff]
    %v38 = vld [vmem:[%s1 + $0x80] sm:$0xff]
    %v39 = vld [vmem:[%s1 + $0x88] sm:$0xff]
    %v40 = vld [vmem:[%s1 + $0x90] sm:$0xff]
    %v41 = vld [vmem:[%s1 + $0x98] sm:$0xff]
    %v42 = vld [vmem:[%s1 + $0xa0] sm:$0xff]
    %v43 = vld [vmem:[%s1 + $0xa8] sm:$0xff]
    %v44 = vld [vmem:[%s1 + $0xb0] sm:$0xff]
    %v45 = vld [vmem:[%s1 + $0xb8] sm:$0xff]
    %v46 = vld [vmem:[%s1 + $0xc0] sm:$0xff]
    %v47 = vld [vmem:[%s1 + $0xc8] sm:$0xff]
    %v48 = vld [vmem:[%s1 + $0xd0] sm:$0xff]
    %v49 = vld [vmem:[%s1 + $0xd8] sm:$0xff]
    %v50 = vld [vmem:[%s1 + $0xe0] sm:$0xff]
    %v51 = vld [vmem:[%s1 + $0xe8] sm:$0xff]
    %v52 = vld [vmem:[%s1 + $0xf0] sm:$0xff]
    %v53 = vld [vmem:[%s1 + $0xf8] sm:$0xff]
    %v54 = vld [vmem:[%s1 + $0x100] sm:$0xff]
    %v55 = vld [vmem:[%s1 + $0x108] sm:$0xff]
    %v56 = vld [vmem:[%s1 + $0x110] sm:$0xff]
    %v57 = vld [vmem:[%s1 + $0x118] sm:$0xff]
    %v58 = vld [vmem:[%s1 + $0x120] sm:$0xff]
    %v59 = vld [vmem:[%s1 + $0x128] sm:$0xff]
    %v60 = vld [vmem:[%s1 + $0x130] sm:$0xff]
    %v61 = vld [vmem:[%s1 + $0x138] sm:$0xff]
    %v62 = vld [vmem:[%s2] sm:$0x1]
    %v64 = vlaneseq
    %v65 = vshrl.u32 %v64, 7
    %v66 = vsub.s32 0, %v65
    %v67 = vrot.slane %v62, %v66
    %v70 = vcombine.high %v21, %v21
    %v72 = vunpack.c.l.s4 1983009808
    %v73 = vunpack.c.0.s8 %v72
    %v74 = vlaneseq
    %v75 = vshrl.u32 %v74, 7
    %v76 = vsub.s32 %v73, %v75
    %v77 = vrot.slane %v21, %v76
    %v79 = vunpack.c.l.s4 1983009808
    %v80 = vunpack.c.0.s8 %v79
    %v81 = vlaneseq
    %v82 = vshrl.u32 %v81, 7
    %v83 = vsub.s32 %v80, %v82
    %v84 = vrot.slane %v70, %v83
    %v85 = vcombine.high %v77, %v77
    %vm88 = vcmask 523264
    %v89 = vsel %vm88, %v84, 0
    %91 = vmatprep.subr.mxu0 0.0
    %92 = vmatpush1.msra.mxu0 %v37
    %93 = vmatprep.subr.mxu0 0.0
    %94 = vmatpush1.msra.mxu0 %v36
    %95 = vmatprep.subr.mxu0 0.0
    %96 = vmatpush1.msra.mxu0 %v35
    %97 = vmatprep.subr.mxu0 0.0
    %98 = vmatpush1.msra.mxu0 %v34
    %99 = vmatprep.subr.mxu0 0.0
    %100 = vmatpush1.msra.mxu0 %v33
    %101 = vmatprep.subr.mxu0 0.0
    %102 = vmatpush1.msra.mxu0 %v32
    %103 = vmatprep.subr.mxu0 0.0
    %104 = vmatpush1.msra.mxu0 %v31
    %105 = vmatprep.subr.mxu0 0.0
    %106 = vmatpush1.msra.mxu0 %v30
    %107 = vmatprep.subr.mxu0 0.0
    %108 = vmatpush1.msra.mxu0 %v29
    %109 = vmatprep.subr.mxu0 0.0
    %110 = vmatpush1.msra.mxu0 %v28
    %111 = vmatprep.subr.mxu0 0.0
    %112 = vmatpush1.msra.mxu0 %v27
    %113 = vmatprep.subr.mxu0 0.0
    %114 = vmatpush1.msra.mxu0 %v26
    %115 = vmatprep.subr.mxu0 0.0
    %116 = vmatpush1.msra.mxu0 %v25
    %117 = vmatprep.subr.mxu0 0.0
    %118 = vmatpush1.msra.mxu0 %v24
    %119 = vmatprep.subr.mxu0 0.0
    %120 = vmatpush1.msra.mxu0 %v23
    %121 = vmatprep.subr.mxu0 0.0
    %122 = vmatpush1.msra.mxu0 %v22
    %123 = vmatprep.subr.mxu0 0.0
    %124 = vmatpush2.msra.mxu0 %v53
    %125 = vmatprep.subr.mxu0 0.0
    %126 = vmatpush2.msra.mxu0 %v52
    %127 = vmatprep.subr.mxu0 0.0
    %128 = vmatpush2.msra.mxu0 %v51
    %129 = vmatprep.subr.mxu0 0.0
    %130 = vmatpush2.msra.mxu0 %v50
    %131 = vmatprep.subr.mxu0 0.0
    %132 = vmatpush2.msra.mxu0 %v49
    %133 = vmatprep.subr.mxu0 0.0
    %134 = vmatpush2.msra.mxu0 %v48
    %135 = vmatprep.subr.mxu0 0.0
    %136 = vmatpush2.msra.mxu0 %v47
    %137 = vmatprep.subr.mxu0 0.0
    %138 = vmatpush2.msra.mxu0 %v46
    %139 = vmatprep.subr.mxu0 0.0
    %140 = vmatpush2.msra.mxu0 %v45
    %141 = vmatprep.subr.mxu0 0.0
    %142 = vmatpush2.msra.mxu0 %v44
    %143 = vmatprep.subr.mxu0 0.0
    %144 = vmatpush2.msra.mxu0 %v43
    %145 = vmatprep.subr.mxu0 0.0
    %146 = vmatpush2.msra.mxu0 %v42
    %147 = vmatprep.subr.mxu0 0.0
    %148 = vmatpush2.msra.mxu0 %v41
    %149 = vmatprep.subr.mxu0 0.0
    %150 = vmatpush2.msra.mxu0 %v40
    %151 = vmatprep.subr.mxu0 0.0
    %152 = vmatpush2.msra.mxu0 %v39
    %153 = vmatprep.subr.mxu0 0.0
    %154 = vmatpush2.msra.mxu0 %v38
    %155 = vmatprep.mubr.f32.mxu0 %v85
    %156 = vmatmul.mubr.f32.gmra.mxu0 %v77
    %v157 = vpop.f32.mrf.mxu0
    %v158 = vadd.f32 %v67, %v157
    %v159 = vpop.f32.mrf.mxu0
    %160 = vdwg.mxu0
    %161 = vmatprep.subr.mxu0 0.0
    %162 = vmatpush1.msra.mxu0 0.0
    %163 = vmatprep.subr.mxu0 0.0
    %164 = vmatpush1.msra.mxu0 0.0
    %165 = vmatprep.subr.mxu0 0.0
    %166 = vmatpush1.msra.mxu0 0.0
    %167 = vmatprep.subr.mxu0 0.0
    %168 = vmatpush1.msra.mxu0 0.0
    %169 = vmatprep.subr.mxu0 0.0
    %170 = vmatpush1.msra.mxu0 0.0
    %171 = vmatprep.subr.mxu0 0.0
    %172 = vmatpush1.msra.mxu0 0.0
    %173 = vmatprep.subr.mxu0 0.0
    %174 = vmatpush1.msra.mxu0 0.0
    %175 = vmatprep.subr.mxu0 0.0
    %176 = vmatpush1.msra.mxu0 0.0
    %177 = vmatprep.subr.mxu0 0.0
    %178 = vmatpush1.msra.mxu0 %v61
    %179 = vmatprep.subr.mxu0 0.0
    %180 = vmatpush1.msra.mxu0 %v60
    %181 = vmatprep.subr.mxu0 0.0
    %182 = vmatpush1.msra.mxu0 %v59
    %183 = vmatprep.subr.mxu0 0.0
    %184 = vmatpush1.msra.mxu0 %v58
    %185 = vmatprep.subr.mxu0 0.0
    %186 = vmatpush1.msra.mxu0 %v57
    %187 = vmatprep.subr.mxu0 0.0
    %188 = vmatpush1.msra.mxu0 %v56
    %189 = vmatprep.subr.mxu0 0.0
    %190 = vmatpush1.msra.mxu0 %v55
    %191 = vmatprep.subr.mxu0 0.0
    %192 = vmatpush1.msra.mxu0 %v54
    %193 = vmatprep.subr.mxu0 0.0
    %194 = vmatpush2.msra.mxu0 0.0
    %195 = vmatprep.subr.mxu0 0.0
    %196 = vmatpush2.msra.mxu0 0.0
    %197 = vmatprep.subr.mxu0 0.0
    %198 = vmatpush2.msra.mxu0 0.0
    %199 = vmatprep.subr.mxu0 0.0
    %200 = vmatpush2.msra.mxu0 0.0
    %201 = vmatprep.subr.mxu0 0.0
    %202 = vmatpush2.msra.mxu0 0.0
    %203 = vmatprep.subr.mxu0 0.0
    %204 = vmatpush2.msra.mxu0 0.0
    %205 = vmatprep.subr.mxu0 0.0
    %206 = vmatpush2.msra.mxu0 0.0
    %207 = vmatprep.subr.mxu0 0.0
    %208 = vmatpush2.msra.mxu0 0.0
    %209 = vmatprep.subr.mxu0 0.0
    %210 = vmatpush2.msra.mxu0 0.0
    %211 = vmatprep.subr.mxu0 0.0
    %212 = vmatpush2.msra.mxu0 0.0
    %213 = vmatprep.subr.mxu0 0.0
    %214 = vmatpush2.msra.mxu0 0.0
    %215 = vmatprep.subr.mxu0 0.0
    %216 = vmatpush2.msra.mxu0 0.0
    %217 = vmatprep.subr.mxu0 0.0
    %218 = vmatpush2.msra.mxu0 0.0
    %219 = vmatprep.subr.mxu0 0.0
    %220 = vmatpush2.msra.mxu0 0.0
    %221 = vmatprep.subr.mxu0 0.0
    %222 = vmatpush2.msra.mxu0 0.0
    %223 = vmatprep.subr.mxu0 0.0
    %224 = vmatpush2.msra.mxu0 0.0
    %225 = vmatprep.mubr.f32.mxu0 0.0
    %226 = vmatmul.mubr.f32.gmra.mxu0 %v89
    %v227 = vpop.f32.mrf.mxu0
    %v228 = vadd.f32 %v158, %v227
    %v229 = vpop.f32.mrf.mxu0
    %230 = vdwg.mxu0
    %v231 = vmax.f32 %v228, 0.0
    %v232 = vld [vmem:[%s3] sm:$0xff]
    %v233 = vld [vmem:[%s3 + $0x8] sm:$0xff]
    %v234 = vld [vmem:[%s3 + $0x10] sm:$0xff]
    %v235 = vld [vmem:[%s3 + $0x18] sm:$0xff]
    %v236 = vld [vmem:[%s3 + $0x20] sm:$0xff]
    %v237 = vld [vmem:[%s3 + $0x28] sm:$0xff]
    %v238 = vld [vmem:[%s3 + $0x30] sm:$0x3]
    %v239 = vld [vmem:[%s4] sm:$0x1]
    %v241 = vlaneseq
    %v242 = vshrl.u32 %v241, 7
    %v243 = vsub.s32 0, %v242
    %v244 = vrot.slane %v239, %v243
    %vm246 = vcmask 408576
    %v248 = vsel %vm246, %v231, 0
    %vm250 = vcmask 1041408
    %v252 = vsel %vm250, %v238, 0
    %254 = vmatprep.subr.mxu0 0.0
    %255 = vmatpush1.msra.mxu0 0.0
    %256 = vmatprep.subr.mxu0 0.0
    %257 = vmatpush1.msra.mxu0 0.0
    %258 = vmatprep.subr.mxu0 0.0
    %259 = vmatpush1.msra.mxu0 0.0
    %260 = vmatprep.subr.mxu0 0.0
    %261 = vmatpush1.msra.mxu0 0.0
    %262 = vmatprep.subr.mxu0 0.0
    %263 = vmatpush1.msra.mxu0 0.0
    %264 = vmatprep.subr.mxu0 0.0
    %265 = vmatpush1.msra.mxu0 0.0
    %266 = vmatprep.subr.mxu0 0.0
    %267 = vmatpush1.msra.mxu0 0.0
    %268 = vmatprep.subr.mxu0 0.0
    %269 = vmatpush1.msra.mxu0 0.0
    %270 = vmatprep.subr.mxu0 0.0
    %271 = vmatpush1.msra.mxu0 0.0
    %272 = vmatprep.subr.mxu0 0.0
    %273 = vmatpush1.msra.mxu0 %v252
    %274 = vmatprep.subr.mxu0 0.0
    %275 = vmatpush1.msra.mxu0 %v237
    %276 = vmatprep.subr.mxu0 0.0
    %277 = vmatpush1.msra.mxu0 %v236
    %278 = vmatprep.subr.mxu0 0.0
    %279 = vmatpush1.msra.mxu0 %v235
    %280 = vmatprep.subr.mxu0 0.0
    %281 = vmatpush1.msra.mxu0 %v234
    %282 = vmatprep.subr.mxu0 0.0
    %283 = vmatpush1.msra.mxu0 %v233
    %284 = vmatprep.subr.mxu0 0.0
    %285 = vmatpush1.msra.mxu0 %v232
    %286 = vmatprep.subr.mxu0 0.0
    %287 = vmatpush2.msra.mxu0 0.0
    %288 = vmatprep.subr.mxu0 0.0
    %289 = vmatpush2.msra.mxu0 0.0
    %290 = vmatprep.subr.mxu0 0.0
    %291 = vmatpush2.msra.mxu0 0.0
    %292 = vmatprep.subr.mxu0 0.0
    %293 = vmatpush2.msra.mxu0 0.0
    %294 = vmatprep.subr.mxu0 0.0
    %295 = vmatpush2.msra.mxu0 0.0
    %296 = vmatprep.subr.mxu0 0.0
    %297 = vmatpush2.msra.mxu0 0.0
    %298 = vmatprep.subr.mxu0 0.0
    %299 = vmatpush2.msra.mxu0 0.0
    %300 = vmatprep.subr.mxu0 0.0
    %301 = vmatpush2.msra.mxu0 0.0
    %302 = vmatprep.subr.mxu0 0.0
    %303 = vmatpush2.msra.mxu0 0.0
    %304 = vmatprep.subr.mxu0 0.0
    %305 = vmatpush2.msra.mxu0 0.0
    %306 = vmatprep.subr.mxu0 0.0
    %307 = vmatpush2.msra.mxu0 0.0
    %308 = vmatprep.subr.mxu0 0.0
    %309 = vmatpush2.msra.mxu0 0.0
    %310 = vmatprep.subr.mxu0 0.0
    %311 = vmatpush2.msra.mxu0 0.0
    %312 = vmatprep.subr.mxu0 0.0
    %313 = vmatpush2.msra.mxu0 0.0
    %314 = vmatprep.subr.mxu0 0.0
    %315 = vmatpush2.msra.mxu0 0.0
    %316 = vmatprep.subr.mxu0 0.0
    %317 = vmatpush2.msra.mxu0 0.0
    %318 = vmatprep.mubr.f32.mxu0 0.0
    %319 = vmatmul.mubr.f32.gmra.mxu0 %v248
    %v320 = vpop.f32.mrf.mxu0
    %v321 = vadd.f32 %v244, %v320
    %v322 = vpop.f32.mrf.mxu0
    %323 = vdwg.mxu0
    %vm324 = vcmask 74752
    %v325 = vsel %vm324, %v321, -inf
    %326 = vmax.xlane.f32.xlu0 %v325
    %v327 = vpop.xlane.xlu0 %326
    %v328 = vsub.f32 %v321, %v327
    %v329 = vmul.f32 %v328, 1.442695
    %v330 = vpow.pop %v329
    %v331 = vsel %vm324, %v330, 0.0
    %332 = vadd.xlane.f32.xlu0 %v331
    %v333 = vpop.xlane.xlu0 %332
    %v334 = vlog2.pop %v333
    %v335 = vmul.f32 %v334, 0.6931472
    %v336 = vsub.f32 %v328, %v335
    %337 = vst.msk [vmem:[#allocation2] sm:$0x3] %vm324, %v336
    // Predicated region
    $region22: #{net_forward.5} parent=1 // pred_check
      _
    $region23: #{net_forward.5} parent=1 // pred_check_branch
      %339 = sbr.rel (0) target = $region25
    $region24: #{net_forward.5} parent=1 // pred_region
      %s341 = ssub.s32 32, 32
      %342 = vsyncadd [#allocation3], %s341
      %s344 = sshll.u32 [#allocation2], 4
      %s345 = int_to_ptr.vmem [resolvable:$true] %s344
      %347 = dma.vmem_to_hbm [thread:$0]  %s345, 32, %s5, [#allocation3]
    $region25: #{net_forward.5} parent=1 // pred_fallthru
      _
    // Predicated region
    $region26: #{net_forward.5} parent=1 // pred_check
      _
    $region27: #{net_forward.5} parent=1 // pred_check_branch
      %349 = sbr.rel (0) target = $region29
    $region28: #{net_forward.5} parent=1 // pred_region
      %350 = dma.done [#allocation3], 32
    $region29: #{net_forward.5} parent=1 // pred_fallthru
      _
    %351 = vsyncpa [#allocation3], 1

</llo_original>
